<compile_context>
chip_gen: v6e
topology: v6e:2x2x1
jax: 0.10.0
libtpu: 0.0.40
codegen_flags: <defaults>
</compile_context>

<pallas_src>
import math

import jax
import jax.numpy as jnp
from jax.experimental import pallas as pl

# ---- model hyper-params (small, consistent with the module) -----------------
B = 2        # batch
S = 8        # sequence length
D = 32       # d_model
H = 4        # number of heads
DK = D // H  # head dim
DFF = 64     # feed-forward hidden dim
BS = B * S
EPS = 1e-6
SCALE = 1.0 / math.sqrt(DK)
NEG = -1e9

# ---- packed-weight slab layout (lane width = 3*D = 96) ----------------------
ROW_WQKV = 0              # (D, 3D)   fused [wq | wk | wv]
ROW_WO = ROW_WQKV + D     # (D, D)
ROW_W1 = ROW_WO + D       # (D, DFF)
ROW_W2 = ROW_W1 + D       # (DFF, D)
ROW_SB = ROW_W2 + DFF     # (BS, BS)  static same-batch additive bias (0 / -1e9)
ROW_BQKV = ROW_SB + BS    # (1, 3D)
ROW_BO = ROW_BQKV + 1     # (1, D)
ROW_B1 = ROW_BO + 1       # (1, DFF)
ROW_B2 = ROW_B1 + 1       # (1, D)
ROW_LN1A = ROW_B2 + 1
ROW_LN1B = ROW_LN1A + 1
ROW_LN2A = ROW_LN1B + 1
ROW_LN2B = ROW_LN2A + 1
ROWS = ((ROW_LN2B + 1 + 7) // 8) * 8   # 184 rows, multiple of 8


def encoder_block_kernel(x_ref, mask_ref, w_ref, o_ref):
    x = x_ref[...]                                          # (BS, D)

    # ---- unpack packed weight slab (static slices of the VMEM ref) ----------
    wqkv = w_ref[ROW_WQKV:ROW_WQKV + D, 0:3 * D]            # (D, 3D)
    wo = w_ref[ROW_WO:ROW_WO + D, 0:D]                      # (D, D)
    w1 = w_ref[ROW_W1:ROW_W1 + D, 0:DFF]                    # (D, DFF)
    w2 = w_ref[ROW_W2:ROW_W2 + DFF, 0:D]                    # (DFF, D)
    sb_bias = w_ref[ROW_SB:ROW_SB + BS, 0:BS]               # (BS, BS) static part
    bqkv = w_ref[ROW_BQKV:ROW_BQKV + 1, 0:3 * D]            # (1, 3D)
    bo = w_ref[ROW_BO:ROW_BO + 1, 0:D]
    b1 = w_ref[ROW_B1:ROW_B1 + 1, 0:DFF]
    b2 = w_ref[ROW_B2:ROW_B2 + 1, 0:D]
    ln1_a = w_ref[ROW_LN1A:ROW_LN1A + 1, 0:D]
    ln1_b = w_ref[ROW_LN1B:ROW_LN1B + 1, 0:D]
    ln2_a = w_ref[ROW_LN2A:ROW_LN2A + 1, 0:D]
    ln2_b = w_ref[ROW_LN2B:ROW_LN2B + 1, 0:D]

    # Per-call padded-key bias (one vreg of VPU work); static same-batch bias is
    # pre-baked in the slab, so no iota / select logic is needed for it.
    key_bias = jnp.where(mask_ref[...] != 0.0, 0.0, NEG)    # (1, BS)
    bias = sb_bias + key_bias                                # (BS, BS)

    def layer_norm(t, a, b):
        mean = jnp.mean(t, axis=-1, keepdims=True)
        # torch.std() default is unbiased (ddof = 1); eps added to std, not var.
        var = jnp.sum((t - mean) ** 2, axis=-1, keepdims=True) * (1.0 / (D - 1))
        return a * (t - mean) / (jnp.sqrt(var) + EPS) + b

    # ---------------- sublayer 1: pre-norm self-attention + residual ---------
    xn = layer_norm(x, ln1_a, ln1_b)
    # Single lane-dense fused QKV projection: (16,32) @ (32,96), one MXU push.
    qkv = jnp.dot(xn, wqkv, preferred_element_type=jnp.float32) + bqkv   # (BS, 3D)

    # Small attention core: statically unrolled per-head loop over 8-lane slices.
    head_outs = []
    for h in range(H):
        qh = qkv[:, h * DK:(h + 1) * DK]                     # (BS, DK)
        kh = qkv[:, D + h * DK:D + (h + 1) * DK]             # (BS, DK)
        vh = qkv[:, 2 * D + h * DK:2 * D + (h + 1) * DK]     # (BS, DK)
        s = jnp.einsum("qd,kd->qk", qh, kh,
                       preferred_element_type=jnp.float32) * SCALE + bias
        m = jnp.max(s, axis=-1, keepdims=True)
        e = jnp.exp(s - m)
        p = e / jnp.sum(e, axis=-1, keepdims=True)           # exact reciprocal
        head_outs.append(jnp.dot(p, vh, preferred_element_type=jnp.float32))
    attn = jnp.concatenate(head_outs, axis=-1)               # (BS, D) == concat-heads

    # Single fused output projection: (16,32) @ (32,32), one MXU push.
    x1 = x + jnp.dot(attn, wo, preferred_element_type=jnp.float32) + bo

    # ---------------- sublayer 2: pre-norm feed-forward + residual -----------
    x1n = layer_norm(x1, ln2_a, ln2_b)
    hid = jnp.maximum(
        jnp.dot(x1n, w1, preferred_element_type=jnp.float32) + b1, 0.0)
    ffn = jnp.dot(hid, w2, preferred_element_type=jnp.float32) + b2
    o_ref[...] = x1 + ffn


def pack_params(p):
    """One-time (init-time) packing of all parameters into a single lane-dense slab."""
    wqkv = jnp.concatenate([p["wq"], p["wk"], p["wv"]], axis=1)      # (D, 3D)
    bqkv = jnp.concatenate([p["bq"], p["bk"], p["bv"]], axis=1)      # (1, 3D)
    batch_id = jnp.arange(BS, dtype=jnp.int32) // S
    sb_bias = jnp.where(batch_id[:, None] == batch_id[None, :],
                        0.0, NEG).astype(jnp.float32)                # (BS, BS)

    ws = jnp.zeros((ROWS, 3 * D), jnp.float32)
    ws = ws.at[ROW_WQKV:ROW_WQKV + D, 0:3 * D].set(wqkv)
    ws = ws.at[ROW_WO:ROW_WO + D, 0:D].set(p["wo"])
    ws = ws.at[ROW_W1:ROW_W1 + D, 0:DFF].set(p["w1"])
    ws = ws.at[ROW_W2:ROW_W2 + DFF, 0:D].set(p["w2"])
    ws = ws.at[ROW_SB:ROW_SB + BS, 0:BS].set(sb_bias)
    ws = ws.at[ROW_BQKV, 0:3 * D].set(bqkv[0])
    ws = ws.at[ROW_BO, 0:D].set(p["bo"][0])
    ws = ws.at[ROW_B1, 0:DFF].set(p["b1"][0])
    ws = ws.at[ROW_B2, 0:D].set(p["b2"][0])
    ws = ws.at[ROW_LN1A, 0:D].set(p["ln1_a"][0])
    ws = ws.at[ROW_LN1B, 0:D].set(p["ln1_b"][0])
    ws = ws.at[ROW_LN2A, 0:D].set(p["ln2_a"][0])
    ws = ws.at[ROW_LN2B, 0:D].set(p["ln2_b"][0])
    return ws


def encoder_block(x, mask, wslab):
    """x: (B, S, D) f32; mask: (B, S) f32 (1.0 = attend, 0.0 = padded key);
    wslab: pre-packed (ROWS, 3*D) parameter slab from pack_params()."""
    x_flat = x.reshape(BS, D)          # contiguous -> free metadata reshape
    mask2d = mask.reshape(1, BS)       # contiguous -> free metadata reshape
    out = pl.pallas_call(
        encoder_block_kernel,
        out_shape=jax.ShapeDtypeStruct((BS, D), jnp.float32),
        # Gridless: single invocation, every operand is a full VMEM-resident block;
        # 3 input DMAs + 1 output DMA total.  No dimension_semantics / vmem limit
        # needed on any generation (footprint ~72 KB).
    )(x_flat, mask2d, wslab)
    return out.reshape(B, S, D)


# ----------------------------- pure-JAX reference -----------------------------
def encoder_block_ref(x, mask, p):
    def ln(v, a, b):
        mean = jnp.mean(v, axis=-1, keepdims=True)
        var = jnp.sum((v - mean) ** 2, axis=-1, keepdims=True) / (v.shape[-1] - 1)
        return a * (v - mean) / (jnp.sqrt(var) + EPS) + b

    xn = ln(x, p["ln1_a"], p["ln1_b"])
    q = xn @ p["wq"] + p["bq"]
    k = xn @ p["wk"] + p["bk"]
    v = xn @ p["wv"] + p["bv"]
    qh = q.reshape(B, S, H, DK).transpose(0, 2, 1, 3)
    kh = k.reshape(B, S, H, DK).transpose(0, 2, 1, 3)
    vh = v.reshape(B, S, H, DK).transpose(0, 2, 1, 3)
    s = jnp.einsum("bhqd,bhkd->bhqk", qh, kh) / math.sqrt(DK)
    s = jnp.where(mask[:, None, None, :] == 0.0, NEG, s)
    a = jax.nn.softmax(s, axis=-1)
    o = jnp.einsum("bhqk,bhkd->bhqd", a, vh).transpose(0, 2, 1, 3).reshape(B, S, D)
    x1 = x + (o @ p["wo"] + p["bo"])
    x1n = ln(x1, p["ln2_a"], p["ln2_b"])
    ffn = jnp.maximum(x1n @ p["w1"] + p["b1"], 0.0) @ p["w2"] + p["b2"]
    return x1 + ffn


def init_params(key):
    keys = jax.random.split(key, 10)
    scl = 0.05
    return {
        # weights stored as (in, out) == PyTorch Linear weight^T
        "wq": scl * jax.random.normal(keys[0], (D, D), jnp.float32),
        "wk": scl * jax.random.normal(keys[1], (D, D), jnp.float32),
        "wv": scl * jax.random.normal(keys[2], (D, D), jnp.float32),
        "wo": scl * jax.random.normal(keys[3], (D, D), jnp.float32),
        "bq": scl * jax.random.normal(keys[4], (1, D), jnp.float32),
        "bk": scl * jax.random.normal(keys[5], (1, D), jnp.float32),
        "bv": scl * jax.random.normal(keys[6], (1, D), jnp.float32),
        "bo": scl * jax.random.normal(keys[7], (1, D), jnp.float32),
        "ln1_a": jnp.ones((1, D), jnp.float32),
        "ln1_b": jnp.zeros((1, D), jnp.float32),
        "ln2_a": jnp.ones((1, D), jnp.float32),
        "ln2_b": jnp.zeros((1, D), jnp.float32),
        "w1": scl * jax.random.normal(keys[8], (D, DFF), jnp.float32),
        "b1": jnp.zeros((1, DFF), jnp.float32),
        "w2": scl * jax.random.normal(keys[9], (DFF, D), jnp.float32),
        "b2": jnp.zeros((1, D), jnp.float32),
    }


if __name__ == "__main__":
    key = jax.random.PRNGKey(0)
    kx, kp = jax.random.split(key)
    x = jax.random.normal(kx, (B, S, D), jnp.float32)
    # src_mask: batch 0 attends everywhere, batch 1 has last two positions padded.
    mask = jnp.ones((B, S), jnp.float32).at[1, S - 2:].set(0.0)
    params = init_params(kp)

    # One-time packing (outside the per-call path, per the review).
    wslab = jax.block_until_ready(pack_params(params))

    out = jax.jit(encoder_block)(x, mask, wslab)
    out = jax.block_until_ready(out)

    ref = encoder_block_ref(x, mask, params)
    assert out.shape == (B, S, D)
    # Exact softmax reciprocal -> tight tolerance restored.
    assert jnp.allclose(out, ref, atol=1e-4, rtol=1e-4), "mismatch vs reference"
    print("KERNEL_OK")
</pallas_src>

<mosaic_0001>
module attributes {stable_mosaic.version = 11 : i64} {
  func.func @encoder_block_kernel(%arg0: memref<16x32xf32, #tpu.memory_space<vmem>>, %arg1: memref<1x16xf32, #tpu.memory_space<vmem>>, %arg2: memref<184x96xf32, #tpu.memory_space<vmem>>, %arg3: memref<16x32xf32, #tpu.memory_space<vmem>>) attributes {dimension_semantics = [], scalar_prefetch = 0 : i64, scratch_operands = 0 : i64, tpu.core_type = #tpu.core_type<tc>} {
    %c0 = arith.constant 0 : index
    %c0_0 = arith.constant 0 : index
    %0 = vector.load %arg0[%c0, %c0_0] : memref<16x32xf32, #tpu.memory_space<vmem>>, vector<16x32xf32>
    %c0_1 = arith.constant 0 : index
    %c0_2 = arith.constant 0 : index
    %1 = vector.load %arg2[%c0_1, %c0_2] : memref<184x96xf32, #tpu.memory_space<vmem>>, vector<32x96xf32>
    %c32 = arith.constant 32 : index
    %c0_3 = arith.constant 0 : index
    %2 = vector.load %arg2[%c32, %c0_3] : memref<184x96xf32, #tpu.memory_space<vmem>>, vector<32x32xf32>
    %c64 = arith.constant 64 : index
    %c0_4 = arith.constant 0 : index
    %3 = vector.load %arg2[%c64, %c0_4] : memref<184x96xf32, #tpu.memory_space<vmem>>, vector<32x64xf32>
    %c96 = arith.constant 96 : index
    %c0_5 = arith.constant 0 : index
    %4 = vector.load %arg2[%c96, %c0_5] : memref<184x96xf32, #tpu.memory_space<vmem>>, vector<64x32xf32>
    %c160 = arith.constant 160 : index
    %c0_6 = arith.constant 0 : index
    %5 = vector.load %arg2[%c160, %c0_6] : memref<184x96xf32, #tpu.memory_space<vmem>>, vector<16x16xf32>
    %c176 = arith.constant 176 : index
    %c0_7 = arith.constant 0 : index
    %6 = vector.load %arg2[%c176, %c0_7] : memref<184x96xf32, #tpu.memory_space<vmem>>, vector<1x96xf32>
    %c177 = arith.constant 177 : index
    %c0_8 = arith.constant 0 : index
    %7 = vector.load %arg2[%c177, %c0_8] : memref<184x96xf32, #tpu.memory_space<vmem>>, vector<1x32xf32>
    %c178 = arith.constant 178 : index
    %c0_9 = arith.constant 0 : index
    %8 = vector.load %arg2[%c178, %c0_9] : memref<184x96xf32, #tpu.memory_space<vmem>>, vector<1x64xf32>
    %c179 = arith.constant 179 : index
    %c0_10 = arith.constant 0 : index
    %9 = vector.load %arg2[%c179, %c0_10] : memref<184x96xf32, #tpu.memory_space<vmem>>, vector<1x32xf32>
    %c180 = arith.constant 180 : index
    %c0_11 = arith.constant 0 : index
    %10 = vector.load %arg2[%c180, %c0_11] : memref<184x96xf32, #tpu.memory_space<vmem>>, vector<1x32xf32>
    %c181 = arith.constant 181 : index
    %c0_12 = arith.constant 0 : index
    %11 = vector.load %arg2[%c181, %c0_12] : memref<184x96xf32, #tpu.memory_space<vmem>>, vector<1x32xf32>
    %c182 = arith.constant 182 : index
    %c0_13 = arith.constant 0 : index
    %12 = vector.load %arg2[%c182, %c0_13] : memref<184x96xf32, #tpu.memory_space<vmem>>, vector<1x32xf32>
    %c183 = arith.constant 183 : index
    %c0_14 = arith.constant 0 : index
    %13 = vector.load %arg2[%c183, %c0_14] : memref<184x96xf32, #tpu.memory_space<vmem>>, vector<1x32xf32>
    %c0_15 = arith.constant 0 : index
    %c0_16 = arith.constant 0 : index
    %14 = vector.load %arg1[%c0_15, %c0_16] : memref<1x16xf32, #tpu.memory_space<vmem>>, vector<1x16xf32>
    %cst = arith.constant 0.000000e+00 : f32
    %15 = vector.broadcast %cst : f32 to vector<1x16xf32>
    %16 = arith.cmpf one, %14, %15 : vector<1x16xf32>
    %cst_17 = arith.constant 0.000000e+00 : f32
    %cst_18 = arith.constant -1.000000e+09 : f32
    %17 = vector.broadcast %cst_17 : f32 to vector<1x16xf32>
    %18 = vector.broadcast %cst_18 : f32 to vector<1x16xf32>
    %19 = arith.select %16, %17, %18 : vector<1x16xi1>, vector<1x16xf32>
    %20 = vector.broadcast %19 : vector<1x16xf32> to vector<16x16xf32>
    %21 = arith.addf %5, %20 : vector<16x16xf32>
    %cst_19 = arith.constant dense<0.000000e+00> : vector<16xf32>
    %22 = vector.multi_reduction <add>, %0, %cst_19 [1] : vector<16x32xf32> to vector<16xf32>
    %23 = vector.shape_cast %22 : vector<16xf32> to vector<16x1xf32>
    %cst_20 = arith.constant 3.200000e+01 : f32
    %24 = vector.broadcast %cst_20 : f32 to vector<16x1xf32>
    %25 = arith.divf %23, %24 : vector<16x1xf32>
    %26 = vector.broadcast %25 : vector<16x1xf32> to vector<16x32xf32>
    %27 = arith.subf %0, %26 : vector<16x32xf32>
    %28 = arith.mulf %27, %27 : vector<16x32xf32>
    %cst_21 = arith.constant dense<0.000000e+00> : vector<16xf32>
    %29 = vector.multi_reduction <add>, %28, %cst_21 [1] : vector<16x32xf32> to vector<16xf32>
    %30 = vector.shape_cast %29 : vector<16xf32> to vector<16x1xf32>
    %cst_22 = arith.constant 0.0322580636 : f32
    %31 = vector.broadcast %cst_22 : f32 to vector<16x1xf32>
    %32 = arith.mulf %30, %31 : vector<16x1xf32>
    %33 = vector.broadcast %25 : vector<16x1xf32> to vector<16x32xf32>
    %34 = arith.subf %0, %33 : vector<16x32xf32>
    %35 = vector.broadcast %10 : vector<1x32xf32> to vector<16x32xf32>
    %36 = arith.mulf %35, %34 : vector<16x32xf32>
    %37 = math.sqrt %32 : vector<16x1xf32>
    %cst_23 = arith.constant 9.99999997E-7 : f32
    %38 = vector.broadcast %cst_23 : f32 to vector<16x1xf32>
    %39 = arith.addf %37, %38 : vector<16x1xf32>
    %40 = vector.broadcast %39 : vector<16x1xf32> to vector<16x32xf32>
    %41 = arith.divf %36, %40 : vector<16x32xf32>
    %42 = vector.broadcast %11 : vector<1x32xf32> to vector<16x32xf32>
    %43 = arith.addf %41, %42 : vector<16x32xf32>
    %cst_24 = arith.constant dense<0.000000e+00> : vector<16x96xf32>
    %44 = tpu.matmul %43, %1, %cst_24 {dimension_numbers = #tpu.dot_dimension_numbers<[1], [0], [0], [1], [0, 0, 1, 1], [], []>} : vector<16x32xf32>, vector<32x96xf32>, vector<16x96xf32> -> vector<16x96xf32>
    %45 = vector.broadcast %6 : vector<1x96xf32> to vector<16x96xf32>
    %46 = arith.addf %44, %45 : vector<16x96xf32>
    %47 = vector.extract_strided_slice %46 {offsets = [0, 0], sizes = [16, 8], strides = [1, 1]} : vector<16x96xf32> to vector<16x8xf32>
    %48 = vector.extract_strided_slice %46 {offsets = [0, 32], sizes = [16, 8], strides = [1, 1]} : vector<16x96xf32> to vector<16x8xf32>
    %49 = vector.extract_strided_slice %46 {offsets = [0, 64], sizes = [16, 8], strides = [1, 1]} : vector<16x96xf32> to vector<16x8xf32>
    "tpu.trace_start"() <{level = 10 : i32, message = "qd,kd->qk"}> : () -> ()
    %cst_25 = arith.constant dense<0.000000e+00> : vector<16x16xf32>
    %50 = tpu.matmul %47, %48, %cst_25 {dimension_numbers = #tpu.dot_dimension_numbers<[1], [1], [0], [0], [0, 0, 1, 0], [], []>} : vector<16x8xf32>, vector<16x8xf32>, vector<16x16xf32> -> vector<16x16xf32>
    "tpu.trace_stop"() : () -> ()
    %cst_26 = arith.constant 0.353553385 : f32
    %51 = vector.broadcast %cst_26 : f32 to vector<16x16xf32>
    %52 = arith.mulf %50, %51 : vector<16x16xf32>
    %53 = arith.addf %52, %21 : vector<16x16xf32>
    %cst_27 = arith.constant dense<0xFF800000> : vector<16xf32>
    %54 = vector.multi_reduction <maximumf>, %53, %cst_27 [1] : vector<16x16xf32> to vector<16xf32>
    %55 = vector.shape_cast %54 : vector<16xf32> to vector<16x1xf32>
    %56 = vector.broadcast %55 : vector<16x1xf32> to vector<16x16xf32>
    %57 = arith.subf %53, %56 : vector<16x16xf32>
    %58 = math.exp %57 : vector<16x16xf32>
    %cst_28 = arith.constant dense<0.000000e+00> : vector<16xf32>
    %59 = vector.multi_reduction <add>, %58, %cst_28 [1] : vector<16x16xf32> to vector<16xf32>
    %60 = vector.shape_cast %59 : vector<16xf32> to vector<16x1xf32>
    %61 = vector.broadcast %60 : vector<16x1xf32> to vector<16x16xf32>
    %62 = arith.divf %58, %61 : vector<16x16xf32>
    %cst_29 = arith.constant dense<0.000000e+00> : vector<16x8xf32>
    %63 = tpu.matmul %62, %49, %cst_29 {dimension_numbers = #tpu.dot_dimension_numbers<[1], [0], [0], [1], [0, 0, 1, 1], [], []>} : vector<16x16xf32>, vector<16x8xf32>, vector<16x8xf32> -> vector<16x8xf32>
    %64 = vector.extract_strided_slice %46 {offsets = [0, 8], sizes = [16, 8], strides = [1, 1]} : vector<16x96xf32> to vector<16x8xf32>
    %65 = vector.extract_strided_slice %46 {offsets = [0, 40], sizes = [16, 8], strides = [1, 1]} : vector<16x96xf32> to vector<16x8xf32>
    %66 = vector.extract_strided_slice %46 {offsets = [0, 72], sizes = [16, 8], strides = [1, 1]} : vector<16x96xf32> to vector<16x8xf32>
    "tpu.trace_start"() <{level = 10 : i32, message = "qd,kd->qk"}> : () -> ()
    %cst_30 = arith.constant dense<0.000000e+00> : vector<16x16xf32>
    %67 = tpu.matmul %64, %65, %cst_30 {dimension_numbers = #tpu.dot_dimension_numbers<[1], [1], [0], [0], [0, 0, 1, 0], [], []>} : vector<16x8xf32>, vector<16x8xf32>, vector<16x16xf32> -> vector<16x16xf32>
    "tpu.trace_stop"() : () -> ()
    %cst_31 = arith.constant 0.353553385 : f32
    %68 = vector.broadcast %cst_31 : f32 to vector<16x16xf32>
    %69 = arith.mulf %67, %68 : vector<16x16xf32>
    %70 = arith.addf %69, %21 : vector<16x16xf32>
    %cst_32 = arith.constant dense<0xFF800000> : vector<16xf32>
    %71 = vector.multi_reduction <maximumf>, %70, %cst_32 [1] : vector<16x16xf32> to vector<16xf32>
    %72 = vector.shape_cast %71 : vector<16xf32> to vector<16x1xf32>
    %73 = vector.broadcast %72 : vector<16x1xf32> to vector<16x16xf32>
    %74 = arith.subf %70, %73 : vector<16x16xf32>
    %75 = math.exp %74 : vector<16x16xf32>
    %cst_33 = arith.constant dense<0.000000e+00> : vector<16xf32>
    %76 = vector.multi_reduction <add>, %75, %cst_33 [1] : vector<16x16xf32> to vector<16xf32>
    %77 = vector.shape_cast %76 : vector<16xf32> to vector<16x1xf32>
    %78 = vector.broadcast %77 : vector<16x1xf32> to vector<16x16xf32>
    %79 = arith.divf %75, %78 : vector<16x16xf32>
    %cst_34 = arith.constant dense<0.000000e+00> : vector<16x8xf32>
    %80 = tpu.matmul %79, %66, %cst_34 {dimension_numbers = #tpu.dot_dimension_numbers<[1], [0], [0], [1], [0, 0, 1, 1], [], []>} : vector<16x16xf32>, vector<16x8xf32>, vector<16x8xf32> -> vector<16x8xf32>
    %81 = vector.extract_strided_slice %46 {offsets = [0, 16], sizes = [16, 8], strides = [1, 1]} : vector<16x96xf32> to vector<16x8xf32>
    %82 = vector.extract_strided_slice %46 {offsets = [0, 48], sizes = [16, 8], strides = [1, 1]} : vector<16x96xf32> to vector<16x8xf32>
    %83 = vector.extract_strided_slice %46 {offsets = [0, 80], sizes = [16, 8], strides = [1, 1]} : vector<16x96xf32> to vector<16x8xf32>
    "tpu.trace_start"() <{level = 10 : i32, message = "qd,kd->qk"}> : () -> ()
    %cst_35 = arith.constant dense<0.000000e+00> : vector<16x16xf32>
    %84 = tpu.matmul %81, %82, %cst_35 {dimension_numbers = #tpu.dot_dimension_numbers<[1], [1], [0], [0], [0, 0, 1, 0], [], []>} : vector<16x8xf32>, vector<16x8xf32>, vector<16x16xf32> -> vector<16x16xf32>
    "tpu.trace_stop"() : () -> ()
    %cst_36 = arith.constant 0.353553385 : f32
    %85 = vector.broadcast %cst_36 : f32 to vector<16x16xf32>
    %86 = arith.mulf %84, %85 : vector<16x16xf32>
    %87 = arith.addf %86, %21 : vector<16x16xf32>
    %cst_37 = arith.constant dense<0xFF800000> : vector<16xf32>
    %88 = vector.multi_reduction <maximumf>, %87, %cst_37 [1] : vector<16x16xf32> to vector<16xf32>
    %89 = vector.shape_cast %88 : vector<16xf32> to vector<16x1xf32>
    %90 = vector.broadcast %89 : vector<16x1xf32> to vector<16x16xf32>
    %91 = arith.subf %87, %90 : vector<16x16xf32>
    %92 = math.exp %91 : vector<16x16xf32>
    %cst_38 = arith.constant dense<0.000000e+00> : vector<16xf32>
    %93 = vector.multi_reduction <add>, %92, %cst_38 [1] : vector<16x16xf32> to vector<16xf32>
    %94 = vector.shape_cast %93 : vector<16xf32> to vector<16x1xf32>
    %95 = vector.broadcast %94 : vector<16x1xf32> to vector<16x16xf32>
    %96 = arith.divf %92, %95 : vector<16x16xf32>
    %cst_39 = arith.constant dense<0.000000e+00> : vector<16x8xf32>
    %97 = tpu.matmul %96, %83, %cst_39 {dimension_numbers = #tpu.dot_dimension_numbers<[1], [0], [0], [1], [0, 0, 1, 1], [], []>} : vector<16x16xf32>, vector<16x8xf32>, vector<16x8xf32> -> vector<16x8xf32>
    %98 = vector.extract_strided_slice %46 {offsets = [0, 24], sizes = [16, 8], strides = [1, 1]} : vector<16x96xf32> to vector<16x8xf32>
    %99 = vector.extract_strided_slice %46 {offsets = [0, 56], sizes = [16, 8], strides = [1, 1]} : vector<16x96xf32> to vector<16x8xf32>
    %100 = vector.extract_strided_slice %46 {offsets = [0, 88], sizes = [16, 8], strides = [1, 1]} : vector<16x96xf32> to vector<16x8xf32>
    "tpu.trace_start"() <{level = 10 : i32, message = "qd,kd->qk"}> : () -> ()
    %cst_40 = arith.constant dense<0.000000e+00> : vector<16x16xf32>
    %101 = tpu.matmul %98, %99, %cst_40 {dimension_numbers = #tpu.dot_dimension_numbers<[1], [1], [0], [0], [0, 0, 1, 0], [], []>} : vector<16x8xf32>, vector<16x8xf32>, vector<16x16xf32> -> vector<16x16xf32>
    "tpu.trace_stop"() : () -> ()
    %cst_41 = arith.constant 0.353553385 : f32
    %102 = vector.broadcast %cst_41 : f32 to vector<16x16xf32>
    %103 = arith.mulf %101, %102 : vector<16x16xf32>
    %104 = arith.addf %103, %21 : vector<16x16xf32>
    %cst_42 = arith.constant dense<0xFF800000> : vector<16xf32>
    %105 = vector.multi_reduction <maximumf>, %104, %cst_42 [1] : vector<16x16xf32> to vector<16xf32>
    %106 = vector.shape_cast %105 : vector<16xf32> to vector<16x1xf32>
    %107 = vector.broadcast %106 : vector<16x1xf32> to vector<16x16xf32>
    %108 = arith.subf %104, %107 : vector<16x16xf32>
    %109 = math.exp %108 : vector<16x16xf32>
    %cst_43 = arith.constant dense<0.000000e+00> : vector<16xf32>
    %110 = vector.multi_reduction <add>, %109, %cst_43 [1] : vector<16x16xf32> to vector<16xf32>
    %111 = vector.shape_cast %110 : vector<16xf32> to vector<16x1xf32>
    %112 = vector.broadcast %111 : vector<16x1xf32> to vector<16x16xf32>
    %113 = arith.divf %109, %112 : vector<16x16xf32>
    %cst_44 = arith.constant dense<0.000000e+00> : vector<16x8xf32>
    %114 = tpu.matmul %113, %100, %cst_44 {dimension_numbers = #tpu.dot_dimension_numbers<[1], [0], [0], [1], [0, 0, 1, 1], [], []>} : vector<16x16xf32>, vector<16x8xf32>, vector<16x8xf32> -> vector<16x8xf32>
    %115 = tpu.concatenate %63, %80, %97, %114 in 1 : vector<16x8xf32>, vector<16x8xf32>, vector<16x8xf32>, vector<16x8xf32> -> vector<16x32xf32>
    %cst_45 = arith.constant dense<0.000000e+00> : vector<16x32xf32>
    %116 = tpu.matmul %115, %2, %cst_45 {dimension_numbers = #tpu.dot_dimension_numbers<[1], [0], [0], [1], [0, 0, 1, 1], [], []>} : vector<16x32xf32>, vector<32x32xf32>, vector<16x32xf32> -> vector<16x32xf32>
    %117 = arith.addf %0, %116 : vector<16x32xf32>
    %118 = vector.broadcast %7 : vector<1x32xf32> to vector<16x32xf32>
    %119 = arith.addf %117, %118 : vector<16x32xf32>
    %cst_46 = arith.constant dense<0.000000e+00> : vector<16xf32>
    %120 = vector.multi_reduction <add>, %119, %cst_46 [1] : vector<16x32xf32> to vector<16xf32>
    %121 = vector.shape_cast %120 : vector<16xf32> to vector<16x1xf32>
    %cst_47 = arith.constant 3.200000e+01 : f32
    %122 = vector.broadcast %cst_47 : f32 to vector<16x1xf32>
    %123 = arith.divf %121, %122 : vector<16x1xf32>
    %124 = vector.broadcast %123 : vector<16x1xf32> to vector<16x32xf32>
    %125 = arith.subf %119, %124 : vector<16x32xf32>
    %126 = arith.mulf %125, %125 : vector<16x32xf32>
    %cst_48 = arith.constant dense<0.000000e+00> : vector<16xf32>
    %127 = vector.multi_reduction <add>, %126, %cst_48 [1] : vector<16x32xf32> to vector<16xf32>
    %128 = vector.shape_cast %127 : vector<16xf32> to vector<16x1xf32>
    %cst_49 = arith.constant 0.0322580636 : f32
    %129 = vector.broadcast %cst_49 : f32 to vector<16x1xf32>
    %130 = arith.mulf %128, %129 : vector<16x1xf32>
    %131 = vector.broadcast %123 : vector<16x1xf32> to vector<16x32xf32>
    %132 = arith.subf %119, %131 : vector<16x32xf32>
    %133 = vector.broadcast %12 : vector<1x32xf32> to vector<16x32xf32>
    %134 = arith.mulf %133, %132 : vector<16x32xf32>
    %135 = math.sqrt %130 : vector<16x1xf32>
    %cst_50 = arith.constant 9.99999997E-7 : f32
    %136 = vector.broadcast %cst_50 : f32 to vector<16x1xf32>
    %137 = arith.addf %135, %136 : vector<16x1xf32>
    %138 = vector.broadcast %137 : vector<16x1xf32> to vector<16x32xf32>
    %139 = arith.divf %134, %138 : vector<16x32xf32>
    %140 = vector.broadcast %13 : vector<1x32xf32> to vector<16x32xf32>
    %141 = arith.addf %139, %140 : vector<16x32xf32>
    %cst_51 = arith.constant dense<0.000000e+00> : vector<16x64xf32>
    %142 = tpu.matmul %141, %3, %cst_51 {dimension_numbers = #tpu.dot_dimension_numbers<[1], [0], [0], [1], [0, 0, 1, 1], [], []>} : vector<16x32xf32>, vector<32x64xf32>, vector<16x64xf32> -> vector<16x64xf32>
    %143 = vector.broadcast %8 : vector<1x64xf32> to vector<16x64xf32>
    %144 = arith.addf %142, %143 : vector<16x64xf32>
    %cst_52 = arith.constant 0.000000e+00 : f32
    %145 = vector.broadcast %cst_52 : f32 to vector<16x64xf32>
    %146 = arith.maximumf %144, %145 : vector<16x64xf32>
    %cst_53 = arith.constant dense<0.000000e+00> : vector<16x32xf32>
    %147 = tpu.matmul %146, %4, %cst_53 {dimension_numbers = #tpu.dot_dimension_numbers<[1], [0], [0], [1], [0, 0, 1, 1], [], []>} : vector<16x64xf32>, vector<64x32xf32>, vector<16x32xf32> -> vector<16x32xf32>
    %148 = vector.broadcast %9 : vector<1x32xf32> to vector<16x32xf32>
    %149 = arith.addf %147, %148 : vector<16x32xf32>
    %150 = arith.addf %119, %149 : vector<16x32xf32>
    %c0_54 = arith.constant 0 : index
    %c0_55 = arith.constant 0 : index
    %151 = vector.load %arg3[%c0_54, %c0_55] : memref<16x32xf32, #tpu.memory_space<vmem>>, vector<16x32xf32>
    tpu.vector_store %arg3[%c0_54, %c0_55], %150 {strides = array<i32>} : memref<16x32xf32, #tpu.memory_space<vmem>>, vector<16x32xf32>,
    return
  }
}

</mosaic_0001>

<llo_original>
// kernel: encoder_block.1
$region0: #{encoder_block.1}
  #allocation0 [shape = 'u32[]', space=smem, size = 0x4, offset = 0x4, fixed_abs, tag = 'smem constant byte address 0x4 - core index']
  #allocation1 [shape = 'u32[144,128]{1,0:T(1,128)}', space=vmem, size = 0x12000, scoped, tag = 'internal scratch']
  %s0 = inlined_call_operand.hbm [shape: f32[16,32], index: 0, kind: input, shape index: {}]
  %s1 = inlined_call_operand.vmem [shape: f32[1,16], index: 1, kind: input, shape index: {}]
  %s2 = inlined_call_operand.hbm [shape: f32[184,96], index: 2, kind: input, shape index: {}]
  %s3 = inlined_call_operand.hbm [shape: f32[16,32], index: 3, kind: output, shape index: {}]
  %s4 = sld [smem:[#allocation0]]
  $region30: #{encoder_block.1} parent=0
    _
  %s6 = ssub.s32 1, %s4
  %s7 = scalar_select 0, %s6, %s4
  $region1: #{encoder_block.1} parent=0
    #allocation2 [shape = 'u8[8192]{0}', space=vmem, size = 0x2000, scoped, tag = 'input window, operand 0, single buffered']
    #allocation3 [shape = 's32[1]{0}', space=sflag, size = 0x4, scoped, tag = 'scoped memory for encoder_block.1']
    #allocation4 [shape = 's32[1]{0}', space=sflag, size = 0x4, scoped, tag = 'scoped memory for encoder_block.1']
    #allocation5 [shape = 'u8[94208]{0}', space=vmem, size = 0x17000, scoped, tag = 'input window, operand 2, single buffered']
    #allocation6 [shape = 's32[1]{0}', space=sflag, size = 0x4, scoped, tag = 'scoped memory for encoder_block.1']
    #allocation7 [shape = 'u8[8192]{0}', space=vmem, size = 0x2000, scoped, tag = 'output window, operand 0, single buffered']
    %8 = vsyncpa [#allocation3], 0
    %9 = vsyncpa [#allocation6], 0
    %10 = vsyncpa [#allocation4], 0
    // Predicated region
    $region2: #{encoder_block.1} parent=1 // pred_check
      _
    $region3: #{encoder_block.1} parent=1 // pred_check_branch
      %12 = sbr.rel (0) target = $region5
    $region4: #{encoder_block.1} parent=1 // pred_region
      %s14 = ssub.s32 256, 256
      %15 = vsyncadd [#allocation3], %s14
      %s16 = sshll.u32 [#allocation2], 4
      %s17 = int_to_ptr.vmem [resolvable:$true] %s16
      %22 = dma.hbm_to_vmem [thread:$0]  %s0, 256, %s17, [#allocation3], 128, 128, 8
    $region5: #{encoder_block.1} parent=1 // pred_fallthru
      _
    // Predicated region
    $region6: #{encoder_block.1} parent=1 // pred_check
      _
    $region7: #{encoder_block.1} parent=1 // pred_check_branch
      %24 = sbr.rel (0) target = $region9
    $region8: #{encoder_block.1} parent=1 // pred_region
      _
    $region9: #{encoder_block.1} parent=1 // pred_fallthru
      _
    // Predicated region
    $region10: #{encoder_block.1} parent=1 // pred_check
      _
    $region11: #{encoder_block.1} parent=1 // pred_check_branch
      %26 = sbr.rel (0) target = $region13
    $region12: #{encoder_block.1} parent=1 // pred_region
      %s28 = ssub.s32 2944, 2944
      %29 = vsyncadd [#allocation6], %s28
      %s30 = sshll.u32 [#allocation5], 4
      %s31 = int_to_ptr.vmem [resolvable:$true] %s30
      %36 = dma.hbm_to_vmem [thread:$0]  %s2, 2944, %s31, [#allocation6], 128, 128, 8
    $region13: #{encoder_block.1} parent=1 // pred_fallthru
      _
    // Predicated region
    $region14: #{encoder_block.1} parent=1 // pred_check
      _
    $region15: #{encoder_block.1} parent=1 // pred_check_branch
      %38 = sbr.rel (0) target = $region17
    $region16: #{encoder_block.1} parent=1 // pred_region
      %39 = dma.done [#allocation3], 256
    $region17: #{encoder_block.1} parent=1 // pred_fallthru
      _
    // Predicated region
    $region18: #{encoder_block.1} parent=1 // pred_check
      _
    $region19: #{encoder_block.1} parent=1 // pred_check_branch
      %41 = sbr.rel (0) target = $region21
    $region20: #{encoder_block.1} parent=1 // pred_region
      %42 = dma.done [#allocation6], 2944
    $region21: #{encoder_block.1} parent=1 // pred_fallthru
      _
    %v43 = vld [vmem:[#allocation2] sm:$0xff]
    %v44 = vld [vmem:[#allocation2 + $0x8] sm:$0xff]
    %v45 = vld [vmem:[#allocation5] sm:$0xff]
    %v46 = vld [vmem:[#allocation5 + $0x8] sm:$0xff]
    %v47 = vld [vmem:[#allocation5 + $0x10] sm:$0xff]
    %v48 = vld [vmem:[#allocation5 + $0x18] sm:$0xff]
    %v49 = vld [vmem:[#allocation5 + $0x20] sm:$0xff]
    %v50 = vld [vmem:[#allocation5 + $0x28] sm:$0xff]
    %v51 = vld [vmem:[#allocation5 + $0x30] sm:$0xff]
    %v52 = vld [vmem:[#allocation5 + $0x38] sm:$0xff]
    %v53 = vld [vmem:[#allocation5 + $0x40] sm:$0xff]
    %v54 = vld [vmem:[#allocation5 + $0x48] sm:$0xff]
    %v55 = vld [vmem:[#allocation5 + $0x50] sm:$0xff]
    %v56 = vld [vmem:[#allocation5 + $0x58] sm:$0xff]
    %v57 = vld [vmem:[#allocation5 + $0x60] sm:$0xff]
    %v58 = vld [vmem:[#allocation5 + $0x68] sm:$0xff]
    %v59 = vld [vmem:[#allocation5 + $0x70] sm:$0xff]
    %v60 = vld [vmem:[#allocation5 + $0x78] sm:$0xff]
    %v61 = vld [vmem:[#allocation5 + $0x80] sm:$0xff]
    %v62 = vld [vmem:[#allocation5 + $0x88] sm:$0xff]
    %v63 = vld [vmem:[#allocation5 + $0x90] sm:$0xff]
    %v64 = vld [vmem:[#allocation5 + $0x98] sm:$0xff]
    %v65 = vld [vmem:[#allocation5 + $0xa0] sm:$0xff]
    %v66 = vld [vmem:[#allocation5 + $0xa8] sm:$0xff]
    %v67 = vld [vmem:[#allocation5 + $0xb0] sm:$0x1]
    %v68 = vld [vmem:[#allocation5 + $0xb1] sm:$0x1]
    %v69 = vld [vmem:[#allocation5 + $0xb2] sm:$0x1]
    %v70 = vld [vmem:[#allocation5 + $0xb3] sm:$0x1]
    %v71 = vld [vmem:[#allocation5 + $0xb4] sm:$0x1]
    %v72 = vld [vmem:[#allocation5 + $0xb5] sm:$0x1]
    %v73 = vld [vmem:[#allocation5 + $0xb6] sm:$0x1]
    %v74 = vld [vmem:[#allocation5 + $0xb7] sm:$0x1]
    %v75 = vld [vmem:[%s1] sm:$0x1]
    %vm76 = vcmp.ne.f32.partialorder %v75, 0.0
    %v77 = vsel %vm76, 0.0, -1e+09
    %v79 = vlaneseq
    %v80 = vshrl.u32 %v79, 7
    %v81 = vsub.s32 0, %v80
    %v82 = vrot.slane %v77, %v81
    %v84 = vadd.f32 %v65, %v82
    %v85 = vadd.f32 %v66, %v82
    %vm86 = vcmask 261120
    %v87 = vsel %vm86, %v43, 0.0
    %88 = vadd.xlane.f32.xlu0 %v87
    %v89 = vpop.xlane.xlu0 %88
    %v90 = vsel %vm86, %v44, 0.0
    %91 = vadd.xlane.f32.xlu0 %v90
    %v92 = vpop.xlane.xlu0 %91
    %v93 = vrcp.pop 32.0
    %v94 = vmul.f32 %v89, %v93
    %v95 = vmul.f32 %v92, %v93
    %v96 = vsub.f32 %v43, %v94
    %v97 = vsub.f32 %v44, %v95
    %v98 = vmul.f32 %v96, %v96
    %v99 = vmul.f32 %v97, %v97
    %v100 = vsel %vm86, %v98, 0.0
    %101 = vadd.xlane.f32.xlu0 %v100
    %v102 = vpop.xlane.xlu0 %101
    %v103 = vsel %vm86, %v99, 0.0
    %104 = vadd.xlane.f32.xlu0 %v103
    %v105 = vpop.xlane.xlu0 %104
    %v106 = vmul.f32 %v102, 0.032258064
    %v107 = vmul.f32 %v105, 0.032258064
    %v108 = vlaneseq
    %v109 = vshrl.u32 %v108, 7
    %v110 = vsub.s32 0, %v109
    %v111 = vrot.slane %v71, %v110
    %v112 = vmul.f32 %v111, %v96
    %v113 = vmul.f32 %v111, %v97
    %v114 = vrsqrt.pop %v106
    %v115 = vmul.f32 %v106, %v114
    %vm116 = vcmp.eq.f32.partialorder %v106, inf
    %v117 = vsel %vm116, %v106, %v115
    %vm118 = vcmp.eq.f32.partialorder %v106, 0.0
    %v119 = vand.u32 %v106, 2147483648
    %v120 = vsel %vm118, %v119, %v117
    %v121 = vrsqrt.pop %v107
    %v122 = vmul.f32 %v107, %v121
    %vm123 = vcmp.eq.f32.partialorder %v107, inf
    %v124 = vsel %vm123, %v107, %v122
    %vm125 = vcmp.eq.f32.partialorder %v107, 0.0
    %v126 = vand.u32 %v107, 2147483648
    %v127 = vsel %vm125, %v126, %v124
    %v128 = vadd.f32 %v120, 1e-06
    %v129 = vadd.f32 %v127, 1e-06
    %v130 = vrcp.pop %v128
    %v131 = vmul.f32 %v112, %v130
    %v132 = vrcp.pop %v129
    %v133 = vmul.f32 %v113, %v132
    %v134 = vlaneseq
    %v135 = vshrl.u32 %v134, 7
    %v136 = vsub.s32 0, %v135
    %v137 = vrot.slane %v72, %v136
    %v138 = vadd.f32 %v131, %v137
    %v139 = vadd.f32 %v133, %v137
    %v140 = vlaneseq
    %v141 = vshrl.u32 %v140, 7
    %v142 = vsub.s32 0, %v141
    %v143 = vrot.slane %v67, %v142
    %v145 = vsel %vm86, %v138, 0
    %v148 = vsel %vm86, %v139, 0
    %150 = vmatprep.subr.mxu0 0.0
    %151 = vmatpush1.msra.mxu0 0.0
    %152 = vmatprep.subr.mxu0 0.0
    %153 = vmatpush1.msra.mxu0 0.0
    %154 = vmatprep.subr.mxu0 0.0
    %155 = vmatpush1.msra.mxu0 0.0
    %156 = vmatprep.subr.mxu0 0.0
    %157 = vmatpush1.msra.mxu0 0.0
    %158 = vmatprep.subr.mxu0 0.0
    %159 = vmatpush1.msra.mxu0 0.0
    %160 = vmatprep.subr.mxu0 0.0
    %161 = vmatpush1.msra.mxu0 0.0
    %162 = vmatprep.subr.mxu0 0.0
    %163 = vmatpush1.msra.mxu0 0.0
    %164 = vmatprep.subr.mxu0 0.0
    %165 = vmatpush1.msra.mxu0 0.0
    %166 = vmatprep.subr.mxu0 0.0
    %167 = vmatpush1.msra.mxu0 0.0
    %168 = vmatprep.subr.mxu0 0.0
    %169 = vmatpush1.msra.mxu0 0.0
    %170 = vmatprep.subr.mxu0 0.0
    %171 = vmatpush1.msra.mxu0 0.0
    %172 = vmatprep.subr.mxu0 0.0
    %173 = vmatpush1.msra.mxu0 0.0
    %174 = vmatprep.subr.mxu0 0.0
    %175 = vmatpush1.msra.mxu0 %v48
    %176 = vmatprep.subr.mxu0 0.0
    %177 = vmatpush1.msra.mxu0 %v47
    %178 = vmatprep.subr.mxu0 0.0
    %179 = vmatpush1.msra.mxu0 %v46
    %180 = vmatprep.subr.mxu0 0.0
    %181 = vmatpush1.msra.mxu0 %v45
    %182 = vmatprep.subr.mxu0 0.0
    %183 = vmatpush2.msra.mxu0 0.0
    %184 = vmatprep.subr.mxu0 0.0
    %185 = vmatpush2.msra.mxu0 0.0
    %186 = vmatprep.subr.mxu0 0.0
    %187 = vmatpush2.msra.mxu0 0.0
    %188 = vmatprep.subr.mxu0 0.0
    %189 = vmatpush2.msra.mxu0 0.0
    %190 = vmatprep.subr.mxu0 0.0
    %191 = vmatpush2.msra.mxu0 0.0
    %192 = vmatprep.subr.mxu0 0.0
    %193 = vmatpush2.msra.mxu0 0.0
    %194 = vmatprep.subr.mxu0 0.0
    %195 = vmatpush2.msra.mxu0 0.0
    %196 = vmatprep.subr.mxu0 0.0
    %197 = vmatpush2.msra.mxu0 0.0
    %198 = vmatprep.subr.mxu0 0.0
    %199 = vmatpush2.msra.mxu0 0.0
    %200 = vmatprep.subr.mxu0 0.0
    %201 = vmatpush2.msra.mxu0 0.0
    %202 = vmatprep.subr.mxu0 0.0
    %203 = vmatpush2.msra.mxu0 0.0
    %204 = vmatprep.subr.mxu0 0.0
    %205 = vmatpush2.msra.mxu0 0.0
    %206 = vmatprep.subr.mxu0 0.0
    %207 = vmatpush2.msra.mxu0 0.0
    %208 = vmatprep.subr.mxu0 0.0
    %209 = vmatpush2.msra.mxu0 0.0
    %210 = vmatprep.subr.mxu0 0.0
    %211 = vmatpush2.msra.mxu0 0.0
    %212 = vmatprep.subr.mxu0 0.0
    %213 = vmatpush2.msra.mxu0 0.0
    %214 = vmatprep.mubr.f32.mxu0 0.0
    %215 = vmatmul.mubr.f32.gmra.mxu0 %v145
    %v216 = vpop.f32.mrf.mxu0
    %v217 = vadd.f32 %v143, %v216
    %v218 = vpop.f32.mrf.mxu0
    %219 = vmatprep.mubr.f32.mxu0 0.0
    %220 = vmatmul.mubr.f32.gmra.mxu0 %v148
    %v221 = vpop.f32.mrf.mxu0
    %v222 = vadd.f32 %v143, %v221
    %v223 = vpop.f32.mrf.mxu0
    %224 = vdwg.mxu0
    %227 = vrot.lane.b32.xlu0 %v217, 96
    %v228 = vpop.permute.xlu0 %227
    %229 = vrot.lane.b32.xlu0 %v222, 96
    %v230 = vpop.permute.xlu0 %229
    %vm231 = vcmask 64512
    %v232 = vsel %vm231, %v217, 0
    %v234 = vsel %vm231, %v222, 0
    %v236 = vsel %vm231, %v228, 0
    %v238 = vsel %vm231, %v230, 0
    %240 = vmatprep.subr.mxu0 0.0
    %241 = vmatpush1.xpose.msra.mxu0 0.0
    %242 = vmatprep.subr.mxu0 0.0
    %243 = vmatpush1.xpose.msra.mxu0 0.0
    %244 = vmatprep.subr.mxu0 0.0
    %245 = vmatpush1.xpose.msra.mxu0 0.0
    %246 = vmatprep.subr.mxu0 0.0
    %247 = vmatpush1.xpose.msra.mxu0 0.0
    %248 = vmatprep.subr.mxu0 0.0
    %249 = vmatpush1.xpose.msra.mxu0 0.0
    %250 = vmatprep.subr.mxu0 0.0
    %251 = vmatpush1.xpose.msra.mxu0 0.0
    %252 = vmatprep.subr.mxu0 0.0
    %253 = vmatpush1.xpose.msra.mxu0 0.0
    %254 = vmatprep.subr.mxu0 0.0
    %255 = vmatpush1.xpose.msra.mxu0 0.0
    %256 = vmatprep.subr.mxu0 0.0
    %257 = vmatpush1.xpose.msra.mxu0 0.0
    %258 = vmatprep.subr.mxu0 0.0
    %259 = vmatpush1.xpose.msra.mxu0 0.0
    %260 = vmatprep.subr.mxu0 0.0
    %261 = vmatpush1.xpose.msra.mxu0 0.0
    %262 = vmatprep.subr.mxu0 0.0
    %263 = vmatpush1.xpose.msra.mxu0 0.0
    %264 = vmatprep.subr.mxu0 0.0
    %265 = vmatpush1.xpose.msra.mxu0 0.0
    %266 = vmatprep.subr.mxu0 0.0
    %267 = vmatpush1.xpose.msra.mxu0 0.0
    %268 = vmatprep.subr.mxu0 0.0
    %269 = vmatpush1.xpose.msra.mxu0 %v238
    %270 = vmatprep.subr.mxu0 0.0
    %271 = vmatpush1.xpose.msra.mxu0 %v236
    %272 = vmatprep.subr.mxu0 0.0
    %273 = vmatpush2.xpose.msra.mxu0 0.0
    %274 = vmatprep.subr.mxu0 0.0
    %275 = vmatpush2.xpose.msra.mxu0 0.0
    %276 = vmatprep.subr.mxu0 0.0
    %277 = vmatpush2.xpose.msra.mxu0 0.0
    %278 = vmatprep.subr.mxu0 0.0
    %279 = vmatpush2.xpose.msra.mxu0 0.0
    %280 = vmatprep.subr.mxu0 0.0
    %281 = vmatpush2.xpose.msra.mxu0 0.0
    %282 = vmatprep.subr.mxu0 0.0
    %283 = vmatpush2.xpose.msra.mxu0 0.0
    %284 = vmatprep.subr.mxu0 0.0
    %285 = vmatpush2.xpose.msra.mxu0 0.0
    %286 = vmatprep.subr.mxu0 0.0
    %287 = vmatpush2.xpose.msra.mxu0 0.0
    %288 = vmatprep.subr.mxu0 0.0
    %289 = vmatpush2.xpose.msra.mxu0 0.0
    %290 = vmatprep.subr.mxu0 0.0
    %291 = vmatpush2.xpose.msra.mxu0 0.0
    %292 = vmatprep.subr.mxu0 0.0
    %293 = vmatpush2.xpose.msra.mxu0 0.0
    %294 = vmatprep.subr.mxu0 0.0
    %295 = vmatpush2.xpose.msra.mxu0 0.0
    %296 = vmatprep.subr.mxu0 0.0
    %297 = vmatpush2.xpose.msra.mxu0 0.0
    %298 = vmatprep.subr.mxu0 0.0
    %299 = vmatpush2.xpose.msra.mxu0 0.0
    %300 = vmatprep.subr.mxu0 0.0
    %301 = vmatpush2.xpose.msra.mxu0 0.0
    %302 = vmatprep.subr.mxu0 0.0
    %303 = vmatpush2.xpose.msra.mxu0 0.0
    %304 = vmatprep.mubr.f32.mxu0 0.0
    %305 = vmatmul.mubr.f32.gmra.mxu0 %v232
    %v306 = vpop.f32.mrf.mxu0
    %v307 = vadd.f32 0.0, %v306
    %v308 = vpop.f32.mrf.mxu0
    %309 = vmatprep.mubr.f32.mxu0 0.0
    %310 = vmatmul.mubr.f32.gmra.mxu0 %v234
    %v311 = vpop.f32.mrf.mxu0
    %v312 = vadd.f32 0.0, %v311
    %v313 = vpop.f32.mrf.mxu0
    %314 = vdwg.mxu0
    %v315 = vmul.f32 %v307, 0.35355338
    %v316 = vmul.f32 %v312, 0.35355338
    %v317 = vadd.f32 %v315, %v84
    %v318 = vadd.f32 %v316, %v85
    %vm319 = vcmask 130048
    %v320 = vsel %vm319, %v317, -inf
    %321 = vmax.xlane.f32.xlu0 %v320
    %v322 = vpop.xlane.xlu0 %321
    %v323 = vsel %vm319, %v318, -inf
    %324 = vmax.xlane.f32.xlu0 %v323
    %v325 = vpop.xlane.xlu0 %324
    %v326 = vsub.f32 %v317, %v322
    %v327 = vsub.f32 %v318, %v325
    %v328 = vmul.f32 %v326, 1.442695
    %v329 = vpow.pop %v328
    %v330 = vmul.f32 %v327, 1.442695
    %v331 = vpow.pop %v330
    %v332 = vsel %vm319, %v329, 0.0
    %333 = vadd.xlane.f32.xlu0 %v332
    %v334 = vpop.xlane.xlu0 %333
    %v335 = vsel %vm319, %v331, 0.0
    %336 = vadd.xlane.f32.xlu0 %v335
    %v337 = vpop.xlane.xlu0 %336
    %v338 = vrcp.pop %v334
    %v339 = vmul.f32 %v329, %v338
    %v340 = vrcp.pop %v337
    %v341 = vmul.f32 %v331, %v340
    %342 = vrot.lane.b32.xlu0 %v217, 64
    %v343 = vpop.permute.xlu0 %342
    %344 = vrot.lane.b32.xlu0 %v222, 64
    %v345 = vpop.permute.xlu0 %344
    %v349 = vsel %vm319, %v339, 0
    %v352 = vsel %vm319, %v341, 0
    %354 = vmatprep.subr.mxu0 0.0
    %355 = vmatpush1.msra.mxu0 0.0
    %356 = vmatprep.subr.mxu0 0.0
    %357 = vmatpush1.msra.mxu0 0.0
    %358 = vmatprep.subr.mxu0 0.0
    %359 = vmatpush1.msra.mxu0 0.0
    %360 = vmatprep.subr.mxu0 0.0
    %361 = vmatpush1.msra.mxu0 0.0
    %362 = vmatprep.subr.mxu0 0.0
    %363 = vmatpush1.msra.mxu0 0.0
    %364 = vmatprep.subr.mxu0 0.0
    %365 = vmatpush1.msra.mxu0 0.0
    %366 = vmatprep.subr.mxu0 0.0
    %367 = vmatpush1.msra.mxu0 0.0
    %368 = vmatprep.subr.mxu0 0.0
    %369 = vmatpush1.msra.mxu0 0.0
    %370 = vmatprep.subr.mxu0 0.0
    %371 = vmatpush1.msra.mxu0 0.0
    %372 = vmatprep.subr.mxu0 0.0
    %373 = vmatpush1.msra.mxu0 0.0
    %374 = vmatprep.subr.mxu0 0.0
    %375 = vmatpush1.msra.mxu0 0.0
    %376 = vmatprep.subr.mxu0 0.0
    %377 = vmatpush1.msra.mxu0 0.0
    %378 = vmatprep.subr.mxu0 0.0
    %379 = vmatpush1.msra.mxu0 0.0
    %380 = vmatprep.subr.mxu0 0.0
    %381 = vmatpush1.msra.mxu0 0.0
    %382 = vmatprep.subr.mxu0 0.0
    %383 = vmatpush1.msra.mxu0 %v345
    %384 = vmatprep.subr.mxu0 0.0
    %385 = vmatpush1.msra.mxu0 %v343
    %386 = vmatprep.subr.mxu0 0.0
    %387 = vmatpush2.msra.mxu0 0.0
    %388 = vmatprep.subr.mxu0 0.0
    %389 = vmatpush2.msra.mxu0 0.0
    %390 = vmatprep.subr.mxu0 0.0
    %391 = vmatpush2.msra.mxu0 0.0
    %392 = vmatprep.subr.mxu0 0.0
    %393 = vmatpush2.msra.mxu0 0.0
    %394 = vmatprep.subr.mxu0 0.0
    %395 = vmatpush2.msra.mxu0 0.0
    %396 = vmatprep.subr.mxu0 0.0
    %397 = vmatpush2.msra.mxu0 0.0
    %398 = vmatprep.subr.mxu0 0.0
    %399 = vmatpush2.msra.mxu0 0.0
    %400 = vmatprep.subr.mxu0 0.0
    %401 = vmatpush2.msra.mxu0 0.0
    %402 = vmatprep.subr.mxu0 0.0
    %403 = vmatpush2.msra.mxu0 0.0
    %404 = vmatprep.subr.mxu0 0.0
    %405 = vmatpush2.msra.mxu0 0.0
    %406 = vmatprep.subr.mxu0 0.0
    %407 = vmatpush2.msra.mxu0 0.0
    %408 = vmatprep.subr.mxu0 0.0
    %409 = vmatpush2.msra.mxu0 0.0
    %410 = vmatprep.subr.mxu0 0.0
    %411 = vmatpush2.msra.mxu0 0.0
    %412 = vmatprep.subr.mxu0 0.0
    %413 = vmatpush2.msra.mxu0 0.0
    %414 = vmatprep.subr.mxu0 0.0
    %415 = vmatpush2.msra.mxu0 0.0
    %416 = vmatprep.subr.mxu0 0.0
    %417 = vmatpush2.msra.mxu0 0.0
    %418 = vmatprep.mubr.f32.mxu0 0.0
    %419 = vmatmul.mubr.f32.gmra.mxu0 %v349
    %v420 = vpop.f32.mrf.mxu0
    %v421 = vadd.f32 0.0, %v420
    %v422 = vpop.f32.mrf.mxu0
    %423 = vmatprep.mubr.f32.mxu0 0.0
    %424 = vmatmul.mubr.f32.gmra.mxu0 %v352
    %v425 = vpop.f32.mrf.mxu0
    %v426 = vadd.f32 0.0, %v425
    %v427 = vpop.f32.mrf.mxu0
    %428 = vdwg.mxu0
    %429 = vrot.lane.b32.xlu0 %v217, 120
    %v430 = vpop.permute.xlu0 %429
    %431 = vrot.lane.b32.xlu0 %v222, 120
    %v432 = vpop.permute.xlu0 %431
    %433 = vrot.lane.b32.xlu0 %v217, 88
    %v434 = vpop.permute.xlu0 %433
    %435 = vrot.lane.b32.xlu0 %v222, 88
    %v436 = vpop.permute.xlu0 %435
    %v437 = vsel %vm231, %v430, 0
    %v439 = vsel %vm231, %v432, 0
    %v441 = vsel %vm231, %v434, 0
    %v443 = vsel %vm231, %v436, 0
    %445 = vmatprep.subr.mxu0 0.0
    %446 = vmatpush1.xpose.msra.mxu0 0.0
    %447 = vmatprep.subr.mxu0 0.0
    %448 = vmatpush1.xpose.msra.mxu0 0.0
    %449 = vmatprep.subr.mxu0 0.0
    %450 = vmatpush1.xpose.msra.mxu0 0.0
    %451 = vmatprep.subr.mxu0 0.0
    %452 = vmatpush1.xpose.msra.mxu0 0.0
    %453 = vmatprep.subr.mxu0 0.0
    %454 = vmatpush1.xpose.msra.mxu0 0.0
    %455 = vmatprep.subr.mxu0 0.0
    %456 = vmatpush1.xpose.msra.mxu0 0.0
    %457 = vmatprep.subr.mxu0 0.0
    %458 = vmatpush1.xpose.msra.mxu0 0.0
    %459 = vmatprep.subr.mxu0 0.0
    %460 = vmatpush1.xpose.msra.mxu0 0.0
    %461 = vmatprep.subr.mxu0 0.0
    %462 = vmatpush1.xpose.msra.mxu0 0.0
    %463 = vmatprep.subr.mxu0 0.0
    %464 = vmatpush1.xpose.msra.mxu0 0.0
    %465 = vmatprep.subr.mxu0 0.0
    %466 = vmatpush1.xpose.msra.mxu0 0.0
    %467 = vmatprep.subr.mxu0 0.0
    %468 = vmatpush1.xpose.msra.mxu0 0.0
    %469 = vmatprep.subr.mxu0 0.0
    %470 = vmatpush1.xpose.msra.mxu0 0.0
    %471 = vmatprep.subr.mxu0 0.0
    %472 = vmatpush1.xpose.msra.mxu0 0.0
    %473 = vmatprep.subr.mxu0 0.0
    %474 = vmatpush1.xpose.msra.mxu0 %v443
    %475 = vmatprep.subr.mxu0 0.0
    %476 = vmatpush1.xpose.msra.mxu0 %v441
    %477 = vmatprep.subr.mxu0 0.0
    %478 = vmatpush2.xpose.msra.mxu0 0.0
    %479 = vmatprep.subr.mxu0 0.0
    %480 = vmatpush2.xpose.msra.mxu0 0.0
    %481 = vmatprep.subr.mxu0 0.0
    %482 = vmatpush2.xpose.msra.mxu0 0.0
    %483 = vmatprep.subr.mxu0 0.0
    %484 = vmatpush2.xpose.msra.mxu0 0.0
    %485 = vmatprep.subr.mxu0 0.0
    %486 = vmatpush2.xpose.msra.mxu0 0.0
    %487 = vmatprep.subr.mxu0 0.0
    %488 = vmatpush2.xpose.msra.mxu0 0.0
    %489 = vmatprep.subr.mxu0 0.0
    %490 = vmatpush2.xpose.msra.mxu0 0.0
    %491 = vmatprep.subr.mxu0 0.0
    %492 = vmatpush2.xpose.msra.mxu0 0.0
    %493 = vmatprep.subr.mxu0 0.0
    %494 = vmatpush2.xpose.msra.mxu0 0.0
    %495 = vmatprep.subr.mxu0 0.0
    %496 = vmatpush2.xpose.msra.mxu0 0.0
    %497 = vmatprep.subr.mxu0 0.0
    %498 = vmatpush2.xpose.msra.mxu0 0.0
    %499 = vmatprep.subr.mxu0 0.0
    %500 = vmatpush2.xpose.msra.mxu0 0.0
    %501 = vmatprep.subr.mxu0 0.0
    %502 = vmatpush2.xpose.msra.mxu0 0.0
    %503 = vmatprep.subr.mxu0 0.0
    %504 = vmatpush2.xpose.msra.mxu0 0.0
    %505 = vmatprep.subr.mxu0 0.0
    %506 = vmatpush2.xpose.msra.mxu0 0.0
    %507 = vmatprep.subr.mxu0 0.0
    %508 = vmatpush2.xpose.msra.mxu0 0.0
    %509 = vmatprep.mubr.f32.mxu0 0.0
    %510 = vmatmul.mubr.f32.gmra.mxu0 %v437
    %v511 = vpop.f32.mrf.mxu0
    %v512 = vadd.f32 0.0, %v511
    %v513 = vpop.f32.mrf.mxu0
    %514 = vmatprep.mubr.f32.mxu0 0.0
    %515 = vmatmul.mubr.f32.gmra.mxu0 %v439
    %v516 = vpop.f32.mrf.mxu0
    %v517 = vadd.f32 0.0, %v516
    %v518 = vpop.f32.mrf.mxu0
    %519 = vdwg.mxu0
    %v520 = vmul.f32 %v512, 0.35355338
    %v521 = vmul.f32 %v517, 0.35355338
    %v522 = vadd.f32 %v520, %v84
    %v523 = vadd.f32 %v521, %v85
    %v524 = vsel %vm319, %v522, -inf
    %525 = vmax.xlane.f32.xlu0 %v524
    %v526 = vpop.xlane.xlu0 %525
    %v527 = vsel %vm319, %v523, -inf
    %528 = vmax.xlane.f32.xlu0 %v527
    %v529 = vpop.xlane.xlu0 %528
    %v530 = vsub.f32 %v522, %v526
    %v531 = vsub.f32 %v523, %v529
    %v532 = vmul.f32 %v530, 1.442695
    %v533 = vpow.pop %v532
    %v534 = vmul.f32 %v531, 1.442695
    %v535 = vpow.pop %v534
    %v536 = vsel %vm319, %v533, 0.0
    %537 = vadd.xlane.f32.xlu0 %v536
    %v538 = vpop.xlane.xlu0 %537
    %v539 = vsel %vm319, %v535, 0.0
    %540 = vadd.xlane.f32.xlu0 %v539
    %v541 = vpop.xlane.xlu0 %540
    %v542 = vrcp.pop %v538
    %v543 = vmul.f32 %v533, %v542
    %v544 = vrcp.pop %v541
    %v545 = vmul.f32 %v535, %v544
    %546 = vrot.lane.b32.xlu0 %v217, 56
    %v547 = vpop.permute.xlu0 %546
    %548 = vrot.lane.b32.xlu0 %v222, 56
    %v549 = vpop.permute.xlu0 %548
    %v553 = vsel %vm319, %v543, 0
    %v556 = vsel %vm319, %v545, 0
    %558 = vmatprep.subr.mxu0 0.0
    %559 = vmatpush1.msra.mxu0 0.0
    %560 = vmatprep.subr.mxu0 0.0
    %561 = vmatpush1.msra.mxu0 0.0
    %562 = vmatprep.subr.mxu0 0.0
    %563 = vmatpush1.msra.mxu0 0.0
    %564 = vmatprep.subr.mxu0 0.0
    %565 = vmatpush1.msra.mxu0 0.0
    %566 = vmatprep.subr.mxu0 0.0
    %567 = vmatpush1.msra.mxu0 0.0
    %568 = vmatprep.subr.mxu0 0.0
    %569 = vmatpush1.msra.mxu0 0.0
    %570 = vmatprep.subr.mxu0 0.0
    %571 = vmatpush1.msra.mxu0 0.0
    %572 = vmatprep.subr.mxu0 0.0
    %573 = vmatpush1.msra.mxu0 0.0
    %574 = vmatprep.subr.mxu0 0.0
    %575 = vmatpush1.msra.mxu0 0.0
    %576 = vmatprep.subr.mxu0 0.0
    %577 = vmatpush1.msra.mxu0 0.0
    %578 = vmatprep.subr.mxu0 0.0
    %579 = vmatpush1.msra.mxu0 0.0
    %580 = vmatprep.subr.mxu0 0.0
    %581 = vmatpush1.msra.mxu0 0.0
    %582 = vmatprep.subr.mxu0 0.0
    %583 = vmatpush1.msra.mxu0 0.0
    %584 = vmatprep.subr.mxu0 0.0
    %585 = vmatpush1.msra.mxu0 0.0
    %586 = vmatprep.subr.mxu0 0.0
    %587 = vmatpush1.msra.mxu0 %v549
    %588 = vmatprep.subr.mxu0 0.0
    %589 = vmatpush1.msra.mxu0 %v547
    %590 = vmatprep.subr.mxu0 0.0
    %591 = vmatpush2.msra.mxu0 0.0
    %592 = vmatprep.subr.mxu0 0.0
    %593 = vmatpush2.msra.mxu0 0.0
    %594 = vmatprep.subr.mxu0 0.0
    %595 = vmatpush2.msra.mxu0 0.0
    %596 = vmatprep.subr.mxu0 0.0
    %597 = vmatpush2.msra.mxu0 0.0
    %598 = vmatprep.subr.mxu0 0.0
    %599 = vmatpush2.msra.mxu0 0.0
    %600 = vmatprep.subr.mxu0 0.0
    %601 = vmatpush2.msra.mxu0 0.0
    %602 = vmatprep.subr.mxu0 0.0
    %603 = vmatpush2.msra.mxu0 0.0
    %604 = vmatprep.subr.mxu0 0.0
    %605 = vmatpush2.msra.mxu0 0.0
    %606 = vmatprep.subr.mxu0 0.0
    %607 = vmatpush2.msra.mxu0 0.0
    %608 = vmatprep.subr.mxu0 0.0
    %609 = vmatpush2.msra.mxu0 0.0
    %610 = vmatprep.subr.mxu0 0.0
    %611 = vmatpush2.msra.mxu0 0.0
    %612 = vmatprep.subr.mxu0 0.0
    %613 = vmatpush2.msra.mxu0 0.0
    %614 = vmatprep.subr.mxu0 0.0
    %615 = vmatpush2.msra.mxu0 0.0
    %616 = vmatprep.subr.mxu0 0.0
    %617 = vmatpush2.msra.mxu0 0.0
    %618 = vmatprep.subr.mxu0 0.0
    %619 = vmatpush2.msra.mxu0 0.0
    %620 = vmatprep.subr.mxu0 0.0
    %621 = vmatpush2.msra.mxu0 0.0
    %622 = vmatprep.mubr.f32.mxu0 0.0
    %623 = vmatmul.mubr.f32.gmra.mxu0 %v553
    %v624 = vpop.f32.mrf.mxu0
    %v625 = vadd.f32 0.0, %v624
    %v626 = vpop.f32.mrf.mxu0
    %627 = vmatprep.mubr.f32.mxu0 0.0
    %628 = vmatmul.mubr.f32.gmra.mxu0 %v556
    %v629 = vpop.f32.mrf.mxu0
    %v630 = vadd.f32 0.0, %v629
    %v631 = vpop.f32.mrf.mxu0
    %632 = vdwg.mxu0
    %633 = vrot.lane.b32.xlu0 %v217, 112
    %v634 = vpop.permute.xlu0 %633
    %635 = vrot.lane.b32.xlu0 %v222, 112
    %v636 = vpop.permute.xlu0 %635
    %637 = vrot.lane.b32.xlu0 %v217, 80
    %v638 = vpop.permute.xlu0 %637
    %639 = vrot.lane.b32.xlu0 %v222, 80
    %v640 = vpop.permute.xlu0 %639
    %v641 = vsel %vm231, %v634, 0
    %v643 = vsel %vm231, %v636, 0
    %v645 = vsel %vm231, %v638, 0
    %v647 = vsel %vm231, %v640, 0
    %649 = vmatprep.subr.mxu0 0.0
    %650 = vmatpush1.xpose.msra.mxu0 0.0
    %651 = vmatprep.subr.mxu0 0.0
    %652 = vmatpush1.xpose.msra.mxu0 0.0
    %653 = vmatprep.subr.mxu0 0.0
    %654 = vmatpush1.xpose.msra.mxu0 0.0
    %655 = vmatprep.subr.mxu0 0.0
    %656 = vmatpush1.xpose.msra.mxu0 0.0
    %657 = vmatprep.subr.mxu0 0.0
    %658 = vmatpush1.xpose.msra.mxu0 0.0
    %659 = vmatprep.subr.mxu0 0.0
    %660 = vmatpush1.xpose.msra.mxu0 0.0
    %661 = vmatprep.subr.mxu0 0.0
    %662 = vmatpush1.xpose.msra.mxu0 0.0
    %663 = vmatprep.subr.mxu0 0.0
    %664 = vmatpush1.xpose.msra.mxu0 0.0
    %665 = vmatprep.subr.mxu0 0.0
    %666 = vmatpush1.xpose.msra.mxu0 0.0
    %667 = vmatprep.subr.mxu0 0.0
    %668 = vmatpush1.xpose.msra.mxu0 0.0
    %669 = vmatprep.subr.mxu0 0.0
    %670 = vmatpush1.xpose.msra.mxu0 0.0
    %671 = vmatprep.subr.mxu0 0.0
    %672 = vmatpush1.xpose.msra.mxu0 0.0
    %673 = vmatprep.subr.mxu0 0.0
    %674 = vmatpush1.xpose.msra.mxu0 0.0
    %675 = vmatprep.subr.mxu0 0.0
    %676 = vmatpush1.xpose.msra.mxu0 0.0
    %677 = vmatprep.subr.mxu0 0.0
    %678 = vmatpush1.xpose.msra.mxu0 %v647
    %679 = vmatprep.subr.mxu0 0.0
    %680 = vmatpush1.xpose.msra.mxu0 %v645
    %681 = vmatprep.subr.mxu0 0.0
    %682 = vmatpush2.xpose.msra.mxu0 0.0
    %683 = vmatprep.subr.mxu0 0.0
    %684 = vmatpush2.xpose.msra.mxu0 0.0
    %685 = vmatprep.subr.mxu0 0.0
    %686 = vmatpush2.xpose.msra.mxu0 0.0
    %687 = vmatprep.subr.mxu0 0.0
    %688 = vmatpush2.xpose.msra.mxu0 0.0
    %689 = vmatprep.subr.mxu0 0.0
    %690 = vmatpush2.xpose.msra.mxu0 0.0
    %691 = vmatprep.subr.mxu0 0.0
    %692 = vmatpush2.xpose.msra.mxu0 0.0
    %693 = vmatprep.subr.mxu0 0.0
    %694 = vmatpush2.xpose.msra.mxu0 0.0
    %695 = vmatprep.subr.mxu0 0.0
    %696 = vmatpush2.xpose.msra.mxu0 0.0
    %697 = vmatprep.subr.mxu0 0.0
    %698 = vmatpush2.xpose.msra.mxu0 0.0
    %699 = vmatprep.subr.mxu0 0.0
    %700 = vmatpush2.xpose.msra.mxu0 0.0
    %701 = vmatprep.subr.mxu0 0.0
    %702 = vmatpush2.xpose.msra.mxu0 0.0
    %703 = vmatprep.subr.mxu0 0.0
    %704 = vmatpush2.xpose.msra.mxu0 0.0
    %705 = vmatprep.subr.mxu0 0.0
    %706 = vmatpush2.xpose.msra.mxu0 0.0
    %707 = vmatprep.subr.mxu0 0.0
    %708 = vmatpush2.xpose.msra.mxu0 0.0
    %709 = vmatprep.subr.mxu0 0.0
    %710 = vmatpush2.xpose.msra.mxu0 0.0
    %711 = vmatprep.subr.mxu0 0.0
    %712 = vmatpush2.xpose.msra.mxu0 0.0
    %713 = vmatprep.mubr.f32.mxu0 0.0
    %714 = vmatmul.mubr.f32.gmra.mxu0 %v641
    %v715 = vpop.f32.mrf.mxu0
    %v716 = vadd.f32 0.0, %v715
    %v717 = vpop.f32.mrf.mxu0
    %718 = vmatprep.mubr.f32.mxu0 0.0
    %719 = vmatmul.mubr.f32.gmra.mxu0 %v643
    %v720 = vpop.f32.mrf.mxu0
    %v721 = vadd.f32 0.0, %v720
    %v722 = vpop.f32.mrf.mxu0
    %723 = vdwg.mxu0
    %v724 = vmul.f32 %v716, 0.35355338
    %v725 = vmul.f32 %v721, 0.35355338
    %v726 = vadd.f32 %v724, %v84
    %v727 = vadd.f32 %v725, %v85
    %v728 = vsel %vm319, %v726, -inf
    %729 = vmax.xlane.f32.xlu0 %v728
    %v730 = vpop.xlane.xlu0 %729
    %v731 = vsel %vm319, %v727, -inf
    %732 = vmax.xlane.f32.xlu0 %v731
    %v733 = vpop.xlane.xlu0 %732
    %v734 = vsub.f32 %v726, %v730
    %v735 = vsub.f32 %v727, %v733
    %v736 = vmul.f32 %v734, 1.442695
    %v737 = vpow.pop %v736
    %v738 = vmul.f32 %v735, 1.442695
    %v739 = vpow.pop %v738
    %v740 = vsel %vm319, %v737, 0.0
    %741 = vadd.xlane.f32.xlu0 %v740
    %v742 = vpop.xlane.xlu0 %741
    %v743 = vsel %vm319, %v739, 0.0
    %744 = vadd.xlane.f32.xlu0 %v743
    %v745 = vpop.xlane.xlu0 %744
    %v746 = vrcp.pop %v742
    %v747 = vmul.f32 %v737, %v746
    %v748 = vrcp.pop %v745
    %v749 = vmul.f32 %v739, %v748
    %750 = vrot.lane.b32.xlu0 %v217, 48
    %v751 = vpop.permute.xlu0 %750
    %752 = vrot.lane.b32.xlu0 %v222, 48
    %v753 = vpop.permute.xlu0 %752
    %v757 = vsel %vm319, %v747, 0
    %v760 = vsel %vm319, %v749, 0
    %762 = vmatprep.subr.mxu0 0.0
    %763 = vmatpush1.msra.mxu0 0.0
    %764 = vmatprep.subr.mxu0 0.0
    %765 = vmatpush1.msra.mxu0 0.0
    %766 = vmatprep.subr.mxu0 0.0
    %767 = vmatpush1.msra.mxu0 0.0
    %768 = vmatprep.subr.mxu0 0.0
    %769 = vmatpush1.msra.mxu0 0.0
    %770 = vmatprep.subr.mxu0 0.0
    %771 = vmatpush1.msra.mxu0 0.0
    %772 = vmatprep.subr.mxu0 0.0
    %773 = vmatpush1.msra.mxu0 0.0
    %774 = vmatprep.subr.mxu0 0.0
    %775 = vmatpush1.msra.mxu0 0.0
    %776 = vmatprep.subr.mxu0 0.0
    %777 = vmatpush1.msra.mxu0 0.0
    %778 = vmatprep.subr.mxu0 0.0
    %779 = vmatpush1.msra.mxu0 0.0
    %780 = vmatprep.subr.mxu0 0.0
    %781 = vmatpush1.msra.mxu0 0.0
    %782 = vmatprep.subr.mxu0 0.0
    %783 = vmatpush1.msra.mxu0 0.0
    %784 = vmatprep.subr.mxu0 0.0
    %785 = vmatpush1.msra.mxu0 0.0
    %786 = vmatprep.subr.mxu0 0.0
    %787 = vmatpush1.msra.mxu0 0.0
    %788 = vmatprep.subr.mxu0 0.0
    %789 = vmatpush1.msra.mxu0 0.0
    %790 = vmatprep.subr.mxu0 0.0
    %791 = vmatpush1.msra.mxu0 %v753
    %792 = vmatprep.subr.mxu0 0.0
    %793 = vmatpush1.msra.mxu0 %v751
    %794 = vmatprep.subr.mxu0 0.0
    %795 = vmatpush2.msra.mxu0 0.0
    %796 = vmatprep.subr.mxu0 0.0
    %797 = vmatpush2.msra.mxu0 0.0
    %798 = vmatprep.subr.mxu0 0.0
    %799 = vmatpush2.msra.mxu0 0.0
    %800 = vmatprep.subr.mxu0 0.0
    %801 = vmatpush2.msra.mxu0 0.0
    %802 = vmatprep.subr.mxu0 0.0
    %803 = vmatpush2.msra.mxu0 0.0
    %804 = vmatprep.subr.mxu0 0.0
    %805 = vmatpush2.msra.mxu0 0.0
    %806 = vmatprep.subr.mxu0 0.0
    %807 = vmatpush2.msra.mxu0 0.0
    %808 = vmatprep.subr.mxu0 0.0
    %809 = vmatpush2.msra.mxu0 0.0
    %810 = vmatprep.subr.mxu0 0.0
    %811 = vmatpush2.msra.mxu0 0.0
    %812 = vmatprep.subr.mxu0 0.0
    %813 = vmatpush2.msra.mxu0 0.0
    %814 = vmatprep.subr.mxu0 0.0
    %815 = vmatpush2.msra.mxu0 0.0
    %816 = vmatprep.subr.mxu0 0.0
    %817 = vmatpush2.msra.mxu0 0.0
    %818 = vmatprep.subr.mxu0 0.0
    %819 = vmatpush2.msra.mxu0 0.0
    %820 = vmatprep.subr.mxu0 0.0
    %821 = vmatpush2.msra.mxu0 0.0
    %822 = vmatprep.subr.mxu0 0.0
    %823 = vmatpush2.msra.mxu0 0.0
    %824 = vmatprep.subr.mxu0 0.0
    %825 = vmatpush2.msra.mxu0 0.0
    %826 = vmatprep.mubr.f32.mxu0 0.0
    %827 = vmatmul.mubr.f32.gmra.mxu0 %v757
    %v828 = vpop.f32.mrf.mxu0
    %v829 = vadd.f32 0.0, %v828
    %v830 = vpop.f32.mrf.mxu0
    %831 = vmatprep.mubr.f32.mxu0 0.0
    %832 = vmatmul.mubr.f32.gmra.mxu0 %v760
    %v833 = vpop.f32.mrf.mxu0
    %v834 = vadd.f32 0.0, %v833
    %v835 = vpop.f32.mrf.mxu0
    %836 = vdwg.mxu0
    %837 = vrot.lane.b32.xlu0 %v217, 104
    %v838 = vpop.permute.xlu0 %837
    %839 = vrot.lane.b32.xlu0 %v222, 104
    %v840 = vpop.permute.xlu0 %839
    %841 = vrot.lane.b32.xlu0 %v217, 72
    %v842 = vpop.permute.xlu0 %841
    %843 = vrot.lane.b32.xlu0 %v222, 72
    %v844 = vpop.permute.xlu0 %843
    %v845 = vsel %vm231, %v838, 0
    %v847 = vsel %vm231, %v840, 0
    %v849 = vsel %vm231, %v842, 0
    %v851 = vsel %vm231, %v844, 0
    %853 = vmatprep.subr.mxu0 0.0
    %854 = vmatpush1.xpose.msra.mxu0 0.0
    %855 = vmatprep.subr.mxu0 0.0
    %856 = vmatpush1.xpose.msra.mxu0 0.0
    %857 = vmatprep.subr.mxu0 0.0
    %858 = vmatpush1.xpose.msra.mxu0 0.0
    %859 = vmatprep.subr.mxu0 0.0
    %860 = vmatpush1.xpose.msra.mxu0 0.0
    %861 = vmatprep.subr.mxu0 0.0
    %862 = vmatpush1.xpose.msra.mxu0 0.0
    %863 = vmatprep.subr.mxu0 0.0
    %864 = vmatpush1.xpose.msra.mxu0 0.0
    %865 = vmatprep.subr.mxu0 0.0
    %866 = vmatpush1.xpose.msra.mxu0 0.0
    %867 = vmatprep.subr.mxu0 0.0
    %868 = vmatpush1.xpose.msra.mxu0 0.0
    %869 = vmatprep.subr.mxu0 0.0
    %870 = vmatpush1.xpose.msra.mxu0 0.0
    %871 = vmatprep.subr.mxu0 0.0
    %872 = vmatpush1.xpose.msra.mxu0 0.0
    %873 = vmatprep.subr.mxu0 0.0
    %874 = vmatpush1.xpose.msra.mxu0 0.0
    %875 = vmatprep.subr.mxu0 0.0
    %876 = vmatpush1.xpose.msra.mxu0 0.0
    %877 = vmatprep.subr.mxu0 0.0
    %878 = vmatpush1.xpose.msra.mxu0 0.0
    %879 = vmatprep.subr.mxu0 0.0
    %880 = vmatpush1.xpose.msra.mxu0 0.0
    %881 = vmatprep.subr.mxu0 0.0
    %882 = vmatpush1.xpose.msra.mxu0 %v851
    %883 = vmatprep.subr.mxu0 0.0
    %884 = vmatpush1.xpose.msra.mxu0 %v849
    %885 = vmatprep.subr.mxu0 0.0
    %886 = vmatpush2.xpose.msra.mxu0 0.0
    %887 = vmatprep.subr.mxu0 0.0
    %888 = vmatpush2.xpose.msra.mxu0 0.0
    %889 = vmatprep.subr.mxu0 0.0
    %890 = vmatpush2.xpose.msra.mxu0 0.0
    %891 = vmatprep.subr.mxu0 0.0
    %892 = vmatpush2.xpose.msra.mxu0 0.0
    %893 = vmatprep.subr.mxu0 0.0
    %894 = vmatpush2.xpose.msra.mxu0 0.0
    %895 = vmatprep.subr.mxu0 0.0
    %896 = vmatpush2.xpose.msra.mxu0 0.0
    %897 = vmatprep.subr.mxu0 0.0
    %898 = vmatpush2.xpose.msra.mxu0 0.0
    %899 = vmatprep.subr.mxu0 0.0
    %900 = vmatpush2.xpose.msra.mxu0 0.0
    %901 = vmatprep.subr.mxu0 0.0
    %902 = vmatpush2.xpose.msra.mxu0 0.0
    %903 = vmatprep.subr.mxu0 0.0
    %904 = vmatpush2.xpose.msra.mxu0 0.0
    %905 = vmatprep.subr.mxu0 0.0
    %906 = vmatpush2.xpose.msra.mxu0 0.0
    %907 = vmatprep.subr.mxu0 0.0
    %908 = vmatpush2.xpose.msra.mxu0 0.0
    %909 = vmatprep.subr.mxu0 0.0
    %910 = vmatpush2.xpose.msra.mxu0 0.0
    %911 = vmatprep.subr.mxu0 0.0
    %912 = vmatpush2.xpose.msra.mxu0 0.0
    %913 = vmatprep.subr.mxu0 0.0
    %914 = vmatpush2.xpose.msra.mxu0 0.0
    %915 = vmatprep.subr.mxu0 0.0
    %916 = vmatpush2.xpose.msra.mxu0 0.0
    %917 = vmatprep.mubr.f32.mxu0 0.0
    %918 = vmatmul.mubr.f32.gmra.mxu0 %v845
    %v919 = vpop.f32.mrf.mxu0
    %v920 = vadd.f32 0.0, %v919
    %v921 = vpop.f32.mrf.mxu0
    %922 = vmatprep.mubr.f32.mxu0 0.0
    %923 = vmatmul.mubr.f32.gmra.mxu0 %v847
    %v924 = vpop.f32.mrf.mxu0
    %v925 = vadd.f32 0.0, %v924
    %v926 = vpop.f32.mrf.mxu0
    %927 = vdwg.mxu0
    %v928 = vmul.f32 %v920, 0.35355338
    %v929 = vmul.f32 %v925, 0.35355338
    %v930 = vadd.f32 %v928, %v84
    %v931 = vadd.f32 %v929, %v85
    %v932 = vsel %vm319, %v930, -inf
    %933 = vmax.xlane.f32.xlu0 %v932
    %v934 = vpop.xlane.xlu0 %933
    %v935 = vsel %vm319, %v931, -inf
    %936 = vmax.xlane.f32.xlu0 %v935
    %v937 = vpop.xlane.xlu0 %936
    %v938 = vsub.f32 %v930, %v934
    %v939 = vsub.f32 %v931, %v937
    %v940 = vmul.f32 %v938, 1.442695
    %v941 = vpow.pop %v940
    %v942 = vmul.f32 %v939, 1.442695
    %v943 = vpow.pop %v942
    %v944 = vsel %vm319, %v941, 0.0
    %945 = vadd.xlane.f32.xlu0 %v944
    %v946 = vpop.xlane.xlu0 %945
    %v947 = vsel %vm319, %v943, 0.0
    %948 = vadd.xlane.f32.xlu0 %v947
    %v949 = vpop.xlane.xlu0 %948
    %v950 = vrcp.pop %v946
    %v951 = vmul.f32 %v941, %v950
    %v952 = vrcp.pop %v949
    %v953 = vmul.f32 %v943, %v952
    %954 = vrot.lane.b32.xlu0 %v217, 40
    %v955 = vpop.permute.xlu0 %954
    %956 = vrot.lane.b32.xlu0 %v222, 40
    %v957 = vpop.permute.xlu0 %956
    %v961 = vsel %vm319, %v951, 0
    %v964 = vsel %vm319, %v953, 0
    %966 = vmatprep.subr.mxu0 0.0
    %967 = vmatpush1.msra.mxu0 0.0
    %968 = vmatprep.subr.mxu0 0.0
    %969 = vmatpush1.msra.mxu0 0.0
    %970 = vmatprep.subr.mxu0 0.0
    %971 = vmatpush1.msra.mxu0 0.0
    %972 = vmatprep.subr.mxu0 0.0
    %973 = vmatpush1.msra.mxu0 0.0
    %974 = vmatprep.subr.mxu0 0.0
    %975 = vmatpush1.msra.mxu0 0.0
    %976 = vmatprep.subr.mxu0 0.0
    %977 = vmatpush1.msra.mxu0 0.0
    %978 = vmatprep.subr.mxu0 0.0
    %979 = vmatpush1.msra.mxu0 0.0
    %980 = vmatprep.subr.mxu0 0.0
    %981 = vmatpush1.msra.mxu0 0.0
    %982 = vmatprep.subr.mxu0 0.0
    %983 = vmatpush1.msra.mxu0 0.0
    %984 = vmatprep.subr.mxu0 0.0
    %985 = vmatpush1.msra.mxu0 0.0
    %986 = vmatprep.subr.mxu0 0.0
    %987 = vmatpush1.msra.mxu0 0.0
    %988 = vmatprep.subr.mxu0 0.0
    %989 = vmatpush1.msra.mxu0 0.0
    %990 = vmatprep.subr.mxu0 0.0
    %991 = vmatpush1.msra.mxu0 0.0
    %992 = vmatprep.subr.mxu0 0.0
    %993 = vmatpush1.msra.mxu0 0.0
    %994 = vmatprep.subr.mxu0 0.0
    %995 = vmatpush1.msra.mxu0 %v957
    %996 = vmatprep.subr.mxu0 0.0
    %997 = vmatpush1.msra.mxu0 %v955
    %998 = vmatprep.subr.mxu0 0.0
    %999 = vmatpush2.msra.mxu0 0.0
    %1000 = vmatprep.subr.mxu0 0.0
    %1001 = vmatpush2.msra.mxu0 0.0
    %1002 = vmatprep.subr.mxu0 0.0
    %1003 = vmatpush2.msra.mxu0 0.0
    %1004 = vmatprep.subr.mxu0 0.0
    %1005 = vmatpush2.msra.mxu0 0.0
    %1006 = vmatprep.subr.mxu0 0.0
    %1007 = vmatpush2.msra.mxu0 0.0
    %1008 = vmatprep.subr.mxu0 0.0
    %1009 = vmatpush2.msra.mxu0 0.0
    %1010 = vmatprep.subr.mxu0 0.0
    %1011 = vmatpush2.msra.mxu0 0.0
    %1012 = vmatprep.subr.mxu0 0.0
    %1013 = vmatpush2.msra.mxu0 0.0
    %1014 = vmatprep.subr.mxu0 0.0
    %1015 = vmatpush2.msra.mxu0 0.0
    %1016 = vmatprep.subr.mxu0 0.0
    %1017 = vmatpush2.msra.mxu0 0.0
    %1018 = vmatprep.subr.mxu0 0.0
    %1019 = vmatpush2.msra.mxu0 0.0
    %1020 = vmatprep.subr.mxu0 0.0
    %1021 = vmatpush2.msra.mxu0 0.0
    %1022 = vmatprep.subr.mxu0 0.0
    %1023 = vmatpush2.msra.mxu0 0.0
    %1024 = vmatprep.subr.mxu0 0.0
    %1025 = vmatpush2.msra.mxu0 0.0
    %1026 = vmatprep.subr.mxu0 0.0
    %1027 = vmatpush2.msra.mxu0 0.0
    %1028 = vmatprep.subr.mxu0 0.0
    %1029 = vmatpush2.msra.mxu0 0.0
    %1030 = vmatprep.mubr.f32.mxu0 0.0
    %1031 = vmatmul.mubr.f32.gmra.mxu0 %v961
    %v1032 = vpop.f32.mrf.mxu0
    %v1033 = vadd.f32 0.0, %v1032
    %v1034 = vpop.f32.mrf.mxu0
    %1035 = vmatprep.mubr.f32.mxu0 0.0
    %1036 = vmatmul.mubr.f32.gmra.mxu0 %v964
    %v1037 = vpop.f32.mrf.mxu0
    %v1038 = vadd.f32 0.0, %v1037
    %v1039 = vpop.f32.mrf.mxu0
    %1040 = vdwg.mxu0
    %1043 = vrot.lane.b32.xlu0 %v625, 8
    %v1044 = vpop.permute.xlu0 %1043
    %1045 = vrot.lane.b32.xlu0 %v630, 8
    %v1046 = vpop.permute.xlu0 %1045
    %1051 = vrot.lane.b32.xlu0 %v829, 16
    %v1052 = vpop.permute.xlu0 %1051
    %1053 = vrot.lane.b32.xlu0 %v834, 16
    %v1054 = vpop.permute.xlu0 %1053
    %1059 = vrot.lane.b32.xlu0 %v1033, 24
    %v1060 = vpop.permute.xlu0 %1059
    %1061 = vrot.lane.b32.xlu0 %v1038, 24
    %v1062 = vpop.permute.xlu0 %1061
    %v1065 = vsel %vm231, %v421, %v1044
    %v1066 = vsel %vm231, %v426, %v1046
    %v1067 = vsel %vm319, %v1065, %v1052
    %v1068 = vsel %vm319, %v1066, %v1054
    %vm1069 = vcmask 195584
    %v1070 = vsel %vm1069, %v1067, %v1060
    %v1071 = vsel %vm1069, %v1068, %v1062
    %v1073 = vsel %vm86, %v1070, 0
    %v1076 = vsel %vm86, %v1071, 0
    %1078 = vmatprep.subr.mxu0 0.0
    %1079 = vmatpush1.msra.mxu0 0.0
    %1080 = vmatprep.subr.mxu0 0.0
    %1081 = vmatpush1.msra.mxu0 0.0
    %1082 = vmatprep.subr.mxu0 0.0
    %1083 = vmatpush1.msra.mxu0 0.0
    %1084 = vmatprep.subr.mxu0 0.0
    %1085 = vmatpush1.msra.mxu0 0.0
    %1086 = vmatprep.subr.mxu0 0.0
    %1087 = vmatpush1.msra.mxu0 0.0
    %1088 = vmatprep.subr.mxu0 0.0
    %1089 = vmatpush1.msra.mxu0 0.0
    %1090 = vmatprep.subr.mxu0 0.0
    %1091 = vmatpush1.msra.mxu0 0.0
    %1092 = vmatprep.subr.mxu0 0.0
    %1093 = vmatpush1.msra.mxu0 0.0
    %1094 = vmatprep.subr.mxu0 0.0
    %1095 = vmatpush1.msra.mxu0 0.0
    %1096 = vmatprep.subr.mxu0 0.0
    %1097 = vmatpush1.msra.mxu0 0.0
    %1098 = vmatprep.subr.mxu0 0.0
    %1099 = vmatpush1.msra.mxu0 0.0
    %1100 = vmatprep.subr.mxu0 0.0
    %1101 = vmatpush1.msra.mxu0 0.0
    %1102 = vmatprep.subr.mxu0 0.0
    %1103 = vmatpush1.msra.mxu0 %v52
    %1104 = vmatprep.subr.mxu0 0.0
    %1105 = vmatpush1.msra.mxu0 %v51
    %1106 = vmatprep.subr.mxu0 0.0
    %1107 = vmatpush1.msra.mxu0 %v50
    %1108 = vmatprep.subr.mxu0 0.0
    %1109 = vmatpush1.msra.mxu0 %v49
    %1110 = vmatprep.subr.mxu0 0.0
    %1111 = vmatpush2.msra.mxu0 0.0
    %1112 = vmatprep.subr.mxu0 0.0
    %1113 = vmatpush2.msra.mxu0 0.0
    %1114 = vmatprep.subr.mxu0 0.0
    %1115 = vmatpush2.msra.mxu0 0.0
    %1116 = vmatprep.subr.mxu0 0.0
    %1117 = vmatpush2.msra.mxu0 0.0
    %1118 = vmatprep.subr.mxu0 0.0
    %1119 = vmatpush2.msra.mxu0 0.0
    %1120 = vmatprep.subr.mxu0 0.0
    %1121 = vmatpush2.msra.mxu0 0.0
    %1122 = vmatprep.subr.mxu0 0.0
    %1123 = vmatpush2.msra.mxu0 0.0
    %1124 = vmatprep.subr.mxu0 0.0
    %1125 = vmatpush2.msra.mxu0 0.0
    %1126 = vmatprep.subr.mxu0 0.0
    %1127 = vmatpush2.msra.mxu0 0.0
    %1128 = vmatprep.subr.mxu0 0.0
    %1129 = vmatpush2.msra.mxu0 0.0
    %1130 = vmatprep.subr.mxu0 0.0
    %1131 = vmatpush2.msra.mxu0 0.0
    %1132 = vmatprep.subr.mxu0 0.0
    %1133 = vmatpush2.msra.mxu0 0.0
    %1134 = vmatprep.subr.mxu0 0.0
    %1135 = vmatpush2.msra.mxu0 0.0
    %1136 = vmatprep.subr.mxu0 0.0
    %1137 = vmatpush2.msra.mxu0 0.0
    %1138 = vmatprep.subr.mxu0 0.0
    %1139 = vmatpush2.msra.mxu0 0.0
    %1140 = vmatprep.subr.mxu0 0.0
    %1141 = vmatpush2.msra.mxu0 0.0
    %1142 = vmatprep.mubr.f32.mxu0 0.0
    %1143 = vmatmul.mubr.f32.gmra.mxu0 %v1073
    %v1144 = vpop.f32.mrf.mxu0
    %v1145 = vadd.f32 0.0, %v1144
    %v1146 = vpop.f32.mrf.mxu0
    %1147 = vmatprep.mubr.f32.mxu0 0.0
    %1148 = vmatmul.mubr.f32.gmra.mxu0 %v1076
    %v1149 = vpop.f32.mrf.mxu0
    %v1150 = vadd.f32 0.0, %v1149
    %v1151 = vpop.f32.mrf.mxu0
    %1152 = vdwg.mxu0
    %v1153 = vadd.f32 %v43, %v1145
    %v1154 = vadd.f32 %v44, %v1150
    %v1155 = vlaneseq
    %v1156 = vshrl.u32 %v1155, 7
    %v1157 = vsub.s32 0, %v1156
    %v1158 = vrot.slane %v68, %v1157
    %v1159 = vadd.f32 %v1153, %v1158
    %v1160 = vadd.f32 %v1154, %v1158
    %v1161 = vsel %vm86, %v1159, 0.0
    %1162 = vadd.xlane.f32.xlu0 %v1161
    %v1163 = vpop.xlane.xlu0 %1162
    %v1164 = vsel %vm86, %v1160, 0.0
    %1165 = vadd.xlane.f32.xlu0 %v1164
    %v1166 = vpop.xlane.xlu0 %1165
    %v1167 = vmul.f32 %v1163, %v93
    %v1168 = vmul.f32 %v1166, %v93
    %v1169 = vsub.f32 %v1159, %v1167
    %v1170 = vsub.f32 %v1160, %v1168
    %v1171 = vmul.f32 %v1169, %v1169
    %v1172 = vmul.f32 %v1170, %v1170
    %v1173 = vsel %vm86, %v1171, 0.0
    %1174 = vadd.xlane.f32.xlu0 %v1173
    %v1175 = vpop.xlane.xlu0 %1174
    %v1176 = vsel %vm86, %v1172, 0.0
    %1177 = vadd.xlane.f32.xlu0 %v1176
    %v1178 = vpop.xlane.xlu0 %1177
    %v1179 = vmul.f32 %v1175, 0.032258064
    %v1180 = vmul.f32 %v1178, 0.032258064
    %v1181 = vlaneseq
    %v1182 = vshrl.u32 %v1181, 7
    %v1183 = vsub.s32 0, %v1182
    %v1184 = vrot.slane %v73, %v1183
    %v1185 = vmul.f32 %v1184, %v1169
    %v1186 = vmul.f32 %v1184, %v1170
    %v1187 = vrsqrt.pop %v1179
    %v1188 = vmul.f32 %v1179, %v1187
    %vm1189 = vcmp.eq.f32.partialorder %v1179, inf
    %v1190 = vsel %vm1189, %v1179, %v1188
    %vm1191 = vcmp.eq.f32.partialorder %v1179, 0.0
    %v1192 = vand.u32 %v1179, 2147483648
    %v1193 = vsel %vm1191, %v1192, %v1190
    %v1194 = vrsqrt.pop %v1180
    %v1195 = vmul.f32 %v1180, %v1194
    %vm1196 = vcmp.eq.f32.partialorder %v1180, inf
    %v1197 = vsel %vm1196, %v1180, %v1195
    %vm1198 = vcmp.eq.f32.partialorder %v1180, 0.0
    %v1199 = vand.u32 %v1180, 2147483648
    %v1200 = vsel %vm1198, %v1199, %v1197
    %v1201 = vadd.f32 %v1193, 1e-06
    %v1202 = vadd.f32 %v1200, 1e-06
    %v1203 = vrcp.pop %v1201
    %v1204 = vmul.f32 %v1185, %v1203
    %v1205 = vrcp.pop %v1202
    %v1206 = vmul.f32 %v1186, %v1205
    %v1207 = vlaneseq
    %v1208 = vshrl.u32 %v1207, 7
    %v1209 = vsub.s32 0, %v1208
    %v1210 = vrot.slane %v74, %v1209
    %v1211 = vadd.f32 %v1204, %v1210
    %v1212 = vadd.f32 %v1206, %v1210
    %v1213 = vlaneseq
    %v1214 = vshrl.u32 %v1213, 7
    %v1215 = vsub.s32 0, %v1214
    %v1216 = vrot.slane %v69, %v1215
    %v1218 = vsel %vm86, %v1211, 0
    %v1221 = vsel %vm86, %v1212, 0
    %1223 = vmatprep.subr.mxu0 0.0
    %1224 = vmatpush1.msra.mxu0 0.0
    %1225 = vmatprep.subr.mxu0 0.0
    %1226 = vmatpush1.msra.mxu0 0.0
    %1227 = vmatprep.subr.mxu0 0.0
    %1228 = vmatpush1.msra.mxu0 0.0
    %1229 = vmatprep.subr.mxu0 0.0
    %1230 = vmatpush1.msra.mxu0 0.0
    %1231 = vmatprep.subr.mxu0 0.0
    %1232 = vmatpush1.msra.mxu0 0.0
    %1233 = vmatprep.subr.mxu0 0.0
    %1234 = vmatpush1.msra.mxu0 0.0
    %1235 = vmatprep.subr.mxu0 0.0
    %1236 = vmatpush1.msra.mxu0 0.0
    %1237 = vmatprep.subr.mxu0 0.0
    %1238 = vmatpush1.msra.mxu0 0.0
    %1239 = vmatprep.subr.mxu0 0.0
    %1240 = vmatpush1.msra.mxu0 0.0
    %1241 = vmatprep.subr.mxu0 0.0
    %1242 = vmatpush1.msra.mxu0 0.0
    %1243 = vmatprep.subr.mxu0 0.0
    %1244 = vmatpush1.msra.mxu0 0.0
    %1245 = vmatprep.subr.mxu0 0.0
    %1246 = vmatpush1.msra.mxu0 0.0
    %1247 = vmatprep.subr.mxu0 0.0
    %1248 = vmatpush1.msra.mxu0 %v56
    %1249 = vmatprep.subr.mxu0 0.0
    %1250 = vmatpush1.msra.mxu0 %v55
    %1251 = vmatprep.subr.mxu0 0.0
    %1252 = vmatpush1.msra.mxu0 %v54
    %1253 = vmatprep.subr.mxu0 0.0
    %1254 = vmatpush1.msra.mxu0 %v53
    %1255 = vmatprep.subr.mxu0 0.0
    %1256 = vmatpush2.msra.mxu0 0.0
    %1257 = vmatprep.subr.mxu0 0.0
    %1258 = vmatpush2.msra.mxu0 0.0
    %1259 = vmatprep.subr.mxu0 0.0
    %1260 = vmatpush2.msra.mxu0 0.0
    %1261 = vmatprep.subr.mxu0 0.0
    %1262 = vmatpush2.msra.mxu0 0.0
    %1263 = vmatprep.subr.mxu0 0.0
    %1264 = vmatpush2.msra.mxu0 0.0
    %1265 = vmatprep.subr.mxu0 0.0
    %1266 = vmatpush2.msra.mxu0 0.0
    %1267 = vmatprep.subr.mxu0 0.0
    %1268 = vmatpush2.msra.mxu0 0.0
    %1269 = vmatprep.subr.mxu0 0.0
    %1270 = vmatpush2.msra.mxu0 0.0
    %1271 = vmatprep.subr.mxu0 0.0
    %1272 = vmatpush2.msra.mxu0 0.0
    %1273 = vmatprep.subr.mxu0 0.0
    %1274 = vmatpush2.msra.mxu0 0.0
    %1275 = vmatprep.subr.mxu0 0.0
    %1276 = vmatpush2.msra.mxu0 0.0
    %1277 = vmatprep.subr.mxu0 0.0
    %1278 = vmatpush2.msra.mxu0 0.0
    %1279 = vmatprep.subr.mxu0 0.0
    %1280 = vmatpush2.msra.mxu0 0.0
    %1281 = vmatprep.subr.mxu0 0.0
    %1282 = vmatpush2.msra.mxu0 0.0
    %1283 = vmatprep.subr.mxu0 0.0
    %1284 = vmatpush2.msra.mxu0 0.0
    %1285 = vmatprep.subr.mxu0 0.0
    %1286 = vmatpush2.msra.mxu0 0.0
    %1287 = vmatprep.mubr.f32.mxu0 0.0
    %1288 = vmatmul.mubr.f32.gmra.mxu0 %v1218
    %v1289 = vpop.f32.mrf.mxu0
    %v1290 = vadd.f32 %v1216, %v1289
    %v1291 = vpop.f32.mrf.mxu0
    %1292 = vmatprep.mubr.f32.mxu0 0.0
    %1293 = vmatmul.mubr.f32.gmra.mxu0 %v1221
    %v1294 = vpop.f32.mrf.mxu0
    %v1295 = vadd.f32 %v1216, %v1294
    %v1296 = vpop.f32.mrf.mxu0
    %1297 = vdwg.mxu0
    %v1298 = vmax.f32 %v1290, 0.0
    %v1299 = vmax.f32 %v1295, 0.0
    %v1300 = vlaneseq
    %v1301 = vshrl.u32 %v1300, 7
    %v1302 = vsub.s32 0, %v1301
    %v1303 = vrot.slane %v70, %v1302
    %vm1304 = vcmask 523264
    %v1306 = vsel %vm1304, %v1298, 0
    %v1309 = vsel %vm1304, %v1299, 0
    %1311 = vmatprep.subr.mxu0 0.0
    %1312 = vmatpush1.msra.mxu0 0.0
    %1313 = vmatprep.subr.mxu0 0.0
    %1314 = vmatpush1.msra.mxu0 0.0
    %1315 = vmatprep.subr.mxu0 0.0
    %1316 = vmatpush1.msra.mxu0 0.0
    %1317 = vmatprep.subr.mxu0 0.0
    %1318 = vmatpush1.msra.mxu0 0.0
    %1319 = vmatprep.subr.mxu0 0.0
    %1320 = vmatpush1.msra.mxu0 0.0
    %1321 = vmatprep.subr.mxu0 0.0
    %1322 = vmatpush1.msra.mxu0 0.0
    %1323 = vmatprep.subr.mxu0 0.0
    %1324 = vmatpush1.msra.mxu0 0.0
    %1325 = vmatprep.subr.mxu0 0.0
    %1326 = vmatpush1.msra.mxu0 0.0
    %1327 = vmatprep.subr.mxu0 0.0
    %1328 = vmatpush1.msra.mxu0 %v64
    %1329 = vmatprep.subr.mxu0 0.0
    %1330 = vmatpush1.msra.mxu0 %v63
    %1331 = vmatprep.subr.mxu0 0.0
    %1332 = vmatpush1.msra.mxu0 %v62
    %1333 = vmatprep.subr.mxu0 0.0
    %1334 = vmatpush1.msra.mxu0 %v61
    %1335 = vmatprep.subr.mxu0 0.0
    %1336 = vmatpush1.msra.mxu0 %v60
    %1337 = vmatprep.subr.mxu0 0.0
    %1338 = vmatpush1.msra.mxu0 %v59
    %1339 = vmatprep.subr.mxu0 0.0
    %1340 = vmatpush1.msra.mxu0 %v58
    %1341 = vmatprep.subr.mxu0 0.0
    %1342 = vmatpush1.msra.mxu0 %v57
    %1343 = vmatprep.subr.mxu0 0.0
    %1344 = vmatpush2.msra.mxu0 0.0
    %1345 = vmatprep.subr.mxu0 0.0
    %1346 = vmatpush2.msra.mxu0 0.0
    %1347 = vmatprep.subr.mxu0 0.0
    %1348 = vmatpush2.msra.mxu0 0.0
    %1349 = vmatprep.subr.mxu0 0.0
    %1350 = vmatpush2.msra.mxu0 0.0
    %1351 = vmatprep.subr.mxu0 0.0
    %1352 = vmatpush2.msra.mxu0 0.0
    %1353 = vmatprep.subr.mxu0 0.0
    %1354 = vmatpush2.msra.mxu0 0.0
    %1355 = vmatprep.subr.mxu0 0.0
    %1356 = vmatpush2.msra.mxu0 0.0
    %1357 = vmatprep.subr.mxu0 0.0
    %1358 = vmatpush2.msra.mxu0 0.0
    %1359 = vmatprep.subr.mxu0 0.0
    %1360 = vmatpush2.msra.mxu0 0.0
    %1361 = vmatprep.subr.mxu0 0.0
    %1362 = vmatpush2.msra.mxu0 0.0
    %1363 = vmatprep.subr.mxu0 0.0
    %1364 = vmatpush2.msra.mxu0 0.0
    %1365 = vmatprep.subr.mxu0 0.0
    %1366 = vmatpush2.msra.mxu0 0.0
    %1367 = vmatprep.subr.mxu0 0.0
    %1368 = vmatpush2.msra.mxu0 0.0
    %1369 = vmatprep.subr.mxu0 0.0
    %1370 = vmatpush2.msra.mxu0 0.0
    %1371 = vmatprep.subr.mxu0 0.0
    %1372 = vmatpush2.msra.mxu0 0.0
    %1373 = vmatprep.subr.mxu0 0.0
    %1374 = vmatpush2.msra.mxu0 0.0
    %1375 = vmatprep.mubr.f32.mxu0 0.0
    %1376 = vmatmul.mubr.f32.gmra.mxu0 %v1306
    %v1377 = vpop.f32.mrf.mxu0
    %v1378 = vadd.f32 %v1303, %v1377
    %v1379 = vpop.f32.mrf.mxu0
    %1380 = vmatprep.mubr.f32.mxu0 0.0
    %1381 = vmatmul.mubr.f32.gmra.mxu0 %v1309
    %v1382 = vpop.f32.mrf.mxu0
    %v1383 = vadd.f32 %v1303, %v1382
    %v1384 = vpop.f32.mrf.mxu0
    %1385 = vdwg.mxu0
    %v1386 = vadd.f32 %v1159, %v1378
    %v1387 = vadd.f32 %v1160, %v1383
    %1388 = vst.msk [vmem:[#allocation7] sm:$0xff] %vm86, %v1386
    %1389 = vst.msk [vmem:[#allocation7 + $0x8] sm:$0xff] %vm86, %v1387
    // Predicated region
    $region22: #{encoder_block.1} parent=1 // pred_check
      _
    $region23: #{encoder_block.1} parent=1 // pred_check_branch
      %1391 = sbr.rel (0) target = $region25
    $region24: #{encoder_block.1} parent=1 // pred_region
      %s1393 = ssub.s32 256, 256
      %1394 = vsyncadd [#allocation4], %s1393
      %s1395 = sshll.u32 [#allocation7], 4
      %s1396 = int_to_ptr.vmem [resolvable:$true] %s1395
      %1401 = dma.vmem_to_hbm [thread:$0]  %s1396, 256, %s3, [#allocation4], 128, 128, 8
    $region25: #{encoder_block.1} parent=1 // pred_fallthru
      _
    // Predicated region
    $region26: #{encoder_block.1} parent=1 // pred_check
      _
    $region27: #{encoder_block.1} parent=1 // pred_check_branch
      %1403 = sbr.rel (0) target = $region29
    $region28: #{encoder_block.1} parent=1 // pred_region
      %1404 = dma.done [#allocation4], 256
    $region29: #{encoder_block.1} parent=1 // pred_fallthru
      _
    %1405 = vsyncpa [#allocation3], 1
    %1406 = vsyncpa [#allocation6], 1
    %1407 = vsyncpa [#allocation4], 1

</llo_original>
